<compile_context>
chip_gen: v5e
topology: v5e:2x2
jax: 0.10.0
libtpu: 0.0.40
codegen_flags: <defaults>
</compile_context>

<pallas_src>
import functools

import jax
import jax.numpy as jnp
from jax import lax
from jax.experimental import pallas as pl
from jax.experimental.pallas import tpu as pltpu


def _round_up(x, m):
    return ((x + m - 1) // m) * m


def _make_mlp_kernel(num_layers, bias_offsets):
    """Whole-MLP kernel on one [block_n, D_in] tile of x (natural layout).

    Intermediates are feature-major ([features, block_n]); block_n is a
    multiple of 128, so every store is a full, unmasked lane-dense vst.
    """

    def kernel(*refs):
        x_ref = refs[0]                      # [bn, D_in]     bf16 (natural layout)
        w_refs = refs[1:1 + num_layers]      # [out, in]      bf16 (torch Linear layout)
        b_ref = refs[1 + num_layers]         # [sum(out), 1]  f32 (packed biases)
        o_ref = refs[2 + num_layers]         # [D_out, bn]

        def bias(li):
            return b_ref[bias_offsets[li]:bias_offsets[li + 1], :]

        # Layer 0: contract D_in of W0 [d1, D_in] with D_in of the x tile
        # [bn, D_in] -> [d1, bn].  No explicit transpose needed anywhere.
        h = lax.dot_general(
            w_refs[0][...], x_ref[...],
            dimension_numbers=(((1,), (1,)), ((), ())),
            preferred_element_type=jnp.float32) + bias(0)

        if num_layers > 1:
            h = jnp.maximum(h, 0.0)                              # ReLU (f32)
            for li in range(1, num_layers):
                h = jnp.dot(w_refs[li][...], h.astype(jnp.bfloat16),
                            preferred_element_type=jnp.float32) + bias(li)
                if li != num_layers - 1:                         # no act. on last layer
                    h = jnp.maximum(h, 0.0)

        o_ref[...] = h.astype(o_ref.dtype)

    return kernel


@functools.partial(jax.jit, static_argnames=("block_n",))
def mlp_forward(x, params, block_n=4096):
    """MLP forward.

    x: [N, D_in] (same layout as the torch module's input).
    params: list of (W [out, in], b [out]) in torch.nn.Linear layout.
    """
    N, D_in = x.shape
    num_layers = len(params)
    out_dims = tuple(int(w.shape[0]) for (w, _) in params)
    D_out = out_dims[-1]
    out_dtype = x.dtype

    bias_offsets = (0,)
    for d in out_dims:
        bias_offsets = bias_offsets + (bias_offsets[-1] + d,)

    # ---- batch-tile selection (all static, trace-time Python) --------------
    try:
        two_core = "v7" in jax.devices()[0].device_kind.lower()   # v7x: 2 TCs/chip
    except Exception:  # pragma: no cover - defensive
        two_core = False

    n128 = _round_up(N, 128)                      # lane dim always a 128-multiple
    bn = min(_round_up(block_n, 128), n128)
    if two_core and n128 // bn < 2 and n128 >= 256:
        bn = _round_up(pl.cdiv(n128, 2), 128)     # give both v7x TCs a tile
    n_pad = _round_up(n128, bn)
    grid_n = n_pad // bn

    # ---- inputs: pad batch once, bf16 for the dominant HBM streams ---------
    x_pad = x if n_pad == N else jnp.pad(x, ((0, n_pad - N), (0, 0)))
    x_bf = x_pad.astype(jnp.bfloat16)
    ws = [w.astype(jnp.bfloat16) for (w, _) in params]
    b_packed = jnp.concatenate([b for (_, b) in params]).reshape(-1, 1).astype(jnp.float32)

    in_specs = [pl.BlockSpec((bn, D_in), lambda i: (i, 0))]        # x tile, natural layout
    for w in ws:
        in_specs.append(pl.BlockSpec(w.shape, lambda i: (0, 0)))   # full weight, invariant
    in_specs.append(pl.BlockSpec(b_packed.shape, lambda i: (0, 0)))

    flops = 2 * n_pad * sum(int(w.shape[0]) * int(w.shape[1]) for (w, _) in params)
    bytes_accessed = (n_pad * D_in * 2                 # bf16 x
                      + n_pad * D_out * 4              # f32 out
                      + 2 * sum(int(w.size) for (w, _) in params)
                      + 4 * int(b_packed.shape[0]))

    out_t = pl.pallas_call(
        _make_mlp_kernel(num_layers, bias_offsets),
        out_shape=jax.ShapeDtypeStruct((D_out, n_pad), out_dtype),
        grid_spec=pltpu.PrefetchScalarGridSpec(
            num_scalar_prefetch=0,
            grid=(grid_n,),
            in_specs=in_specs,
            out_specs=pl.BlockSpec((D_out, bn), lambda i: (0, i)),
        ),
        compiler_params=pltpu.CompilerParams(
            dimension_semantics=("parallel",)),
        cost_estimate=pl.CostEstimate(
            flops=flops, transcendentals=0, bytes_accessed=bytes_accessed),
    )(x_bf, *ws, b_packed)

    # Output is feature-major [D_out, n_pad]; transposing a 16-row array and
    # slicing off the padded rows is cheap.
    return out_t.T[:N]


def init_mlp_params(key, shapes):
    """torch.nn.Linear-style init: W is [out, in], b is [out]."""
    params = []
    for fan_in, fan_out in zip(shapes[:-1], shapes[1:]):
        key, kw, kb = jax.random.split(key, 3)
        bound = 1.0 / jnp.sqrt(fan_in)
        w = jax.random.uniform(kw, (fan_out, fan_in), jnp.float32, -bound, bound)
        b = jax.random.uniform(kb, (fan_out,), jnp.float32, -bound, bound)
        params.append((w, b))
    return params


def mlp_reference(x, params):
    """Plain-JAX f32 reference of the same forward (correctness check)."""
    h = x
    for (w, b) in params[:-1]:
        h = jnp.maximum(h @ w.T + b, 0.0)
    w, b = params[-1]
    return h @ w.T + b


if __name__ == "__main__":
    key = jax.random.PRNGKey(0)
    kx, kp = jax.random.split(key)

    shapes = [32, 64, 128, 16]          # MLP([32, 64, 128, 16], activation=relu)
    params = init_mlp_params(kp, shapes)

    # Aligned batch: single tile on v5e/v6e, split into 2 tiles on v7x.
    x = jax.random.normal(kx, (1024, shapes[0]), jnp.float32)
    out = jax.block_until_ready(mlp_forward(x, params))
    ref = mlp_reference(x, params)
    assert out.shape == (1024, shapes[-1])
    # bf16 inputs/weights with f32 accumulation -> relaxed tolerance vs f32 ref.
    assert jnp.allclose(out, ref, atol=5e-2, rtol=5e-2), "mismatch vs reference (N=1024)"

    # Non-128-multiple batch: exercises the pad-to-128 + slice path.
    x2 = jax.random.normal(kx, (200, shapes[0]), jnp.float32)
    out2 = jax.block_until_ready(mlp_forward(x2, params))
    ref2 = mlp_reference(x2, params)
    assert out2.shape == (200, shapes[-1])
    assert jnp.allclose(out2, ref2, atol=5e-2, rtol=5e-2), "mismatch vs reference (N=200)"

    print("KERNEL_OK")
</pallas_src>

<mosaic_0001>
module attributes {stable_mosaic.version = 11 : i64} {
  func.func @kernel(%arg0: i32, %arg1: memref<1024x32xbf16, #tpu.memory_space<vmem>>, %arg2: memref<64x32xbf16, #tpu.memory_space<vmem>>, %arg3: memref<128x64xbf16, #tpu.memory_space<vmem>>, %arg4: memref<16x128xbf16, #tpu.memory_space<vmem>>, %arg5: memref<208x1xf32, #tpu.memory_space<vmem>>, %arg6: memref<16x1024xf32, #tpu.memory_space<vmem>>) attributes {dimension_semantics = [#tpu.dimension_semantics<parallel>], iteration_bounds = array<i64: 1>, scalar_prefetch = 0 : i64, scratch_operands = 0 : i64, tpu.core_type = #tpu.core_type<tc>, window_params = [{transform_indices = @transform_0, window_bounds = array<i64: 1024, 32>}, {pipeline_mode = #tpu.pipeline_mode<synchronous>, transform_indices = @transform_1, window_bounds = array<i64: 64, 32>}, {pipeline_mode = #tpu.pipeline_mode<synchronous>, transform_indices = @transform_2, window_bounds = array<i64: 128, 64>}, {pipeline_mode = #tpu.pipeline_mode<synchronous>, transform_indices = @transform_3, window_bounds = array<i64: 16, 128>}, {pipeline_mode = #tpu.pipeline_mode<synchronous>, transform_indices = @transform_4, window_bounds = array<i64: 208, 1>}, {transform_indices = @transform_5, window_bounds = array<i64: 16, 1024>}]} {
    %c0 = arith.constant 0 : index
    %c0_0 = arith.constant 0 : index
    %0 = vector.load %arg2[%c0, %c0_0] : memref<64x32xbf16, #tpu.memory_space<vmem>>, vector<64x32xbf16>
    %c0_1 = arith.constant 0 : index
    %c0_2 = arith.constant 0 : index
    %1 = vector.load %arg1[%c0_1, %c0_2] : memref<1024x32xbf16, #tpu.memory_space<vmem>>, vector<1024x32xbf16>
    %cst = arith.constant dense<0.000000e+00> : vector<64x1024xf32>
    %2 = tpu.matmul %0, %1, %cst {dimension_numbers = #tpu.dot_dimension_numbers<[1], [1], [0], [0], [0, 0, 1, 0], [], []>} : vector<64x32xbf16>, vector<1024x32xbf16>, vector<64x1024xf32> -> vector<64x1024xf32>
    %c0_3 = arith.constant 0 : index
    %c0_4 = arith.constant 0 : index
    %3 = vector.load %arg5[%c0_3, %c0_4] : memref<208x1xf32, #tpu.memory_space<vmem>>, vector<64x1xf32>
    %4 = vector.broadcast %3 : vector<64x1xf32> to vector<64x1024xf32>
    %5 = arith.addf %2, %4 : vector<64x1024xf32>
    %cst_5 = arith.constant 0.000000e+00 : f32
    %6 = vector.broadcast %cst_5 : f32 to vector<64x1024xf32>
    %7 = arith.maximumf %5, %6 : vector<64x1024xf32>
    %c0_6 = arith.constant 0 : index
    %c0_7 = arith.constant 0 : index
    %8 = vector.load %arg3[%c0_6, %c0_7] : memref<128x64xbf16, #tpu.memory_space<vmem>>, vector<128x64xbf16>
    %9 = arith.truncf %7 : vector<64x1024xf32> to vector<64x1024xbf16>
    %cst_8 = arith.constant dense<0.000000e+00> : vector<128x1024xf32>
    %10 = tpu.matmul %8, %9, %cst_8 {dimension_numbers = #tpu.dot_dimension_numbers<[1], [0], [0], [1], [0, 0, 1, 1], [], []>} : vector<128x64xbf16>, vector<64x1024xbf16>, vector<128x1024xf32> -> vector<128x1024xf32>
    %c64 = arith.constant 64 : index
    %c0_9 = arith.constant 0 : index
    %11 = vector.load %arg5[%c64, %c0_9] : memref<208x1xf32, #tpu.memory_space<vmem>>, vector<128x1xf32>
    %12 = vector.broadcast %11 : vector<128x1xf32> to vector<128x1024xf32>
    %13 = arith.addf %10, %12 : vector<128x1024xf32>
    %cst_10 = arith.constant 0.000000e+00 : f32
    %14 = vector.broadcast %cst_10 : f32 to vector<128x1024xf32>
    %15 = arith.maximumf %13, %14 : vector<128x1024xf32>
    %c0_11 = arith.constant 0 : index
    %c0_12 = arith.constant 0 : index
    %16 = vector.load %arg4[%c0_11, %c0_12] : memref<16x128xbf16, #tpu.memory_space<vmem>>, vector<16x128xbf16>
    %17 = arith.truncf %15 : vector<128x1024xf32> to vector<128x1024xbf16>
    %cst_13 = arith.constant dense<0.000000e+00> : vector<16x1024xf32>
    %18 = tpu.matmul %16, %17, %cst_13 {dimension_numbers = #tpu.dot_dimension_numbers<[1], [0], [0], [1], [0, 0, 1, 1], [], []>} : vector<16x128xbf16>, vector<128x1024xbf16>, vector<16x1024xf32> -> vector<16x1024xf32>
    %c192 = arith.constant 192 : index
    %c0_14 = arith.constant 0 : index
    %19 = vector.load %arg5[%c192, %c0_14] : memref<208x1xf32, #tpu.memory_space<vmem>>, vector<16x1xf32>
    %20 = vector.broadcast %19 : vector<16x1xf32> to vector<16x1024xf32>
    %21 = arith.addf %18, %20 : vector<16x1024xf32>
    %c0_15 = arith.constant 0 : index
    %c0_16 = arith.constant 0 : index
    %22 = vector.load %arg6[%c0_15, %c0_16] : memref<16x1024xf32, #tpu.memory_space<vmem>>, vector<16x1024xf32>
    tpu.vector_store %arg6[%c0_15, %c0_16], %21 {strides = array<i32>} : memref<16x1024xf32, #tpu.memory_space<vmem>>, vector<16x1024xf32>,
    return
  }
  func.func @transform_0(%arg0: i32) -> (i32, i32) {
    %c0_i32 = arith.constant 0 : i32
    %c0_i32_0 = arith.constant 0 : i32
    return %arg0, %c0_i32 : i32, i32
  }
  func.func @transform_1(%arg0: i32) -> (i32, i32) {
    %c0_i32 = arith.constant 0 : i32
    %c0_i32_0 = arith.constant 0 : i32
    %c0_i32_1 = arith.constant 0 : i32
    return %c0_i32, %c0_i32_0 : i32, i32
  }
  func.func @transform_2(%arg0: i32) -> (i32, i32) {
    %c0_i32 = arith.constant 0 : i32
    %c0_i32_0 = arith.constant 0 : i32
    %c0_i32_1 = arith.constant 0 : i32
    return %c0_i32, %c0_i32_0 : i32, i32
  }
  func.func @transform_3(%arg0: i32) -> (i32, i32) {
    %c0_i32 = arith.constant 0 : i32
    %c0_i32_0 = arith.constant 0 : i32
    %c0_i32_1 = arith.constant 0 : i32
    return %c0_i32, %c0_i32_0 : i32, i32
  }
  func.func @transform_4(%arg0: i32) -> (i32, i32) {
    %c0_i32 = arith.constant 0 : i32
    %c0_i32_0 = arith.constant 0 : i32
    %c0_i32_1 = arith.constant 0 : i32
    return %c0_i32, %c0_i32_0 : i32, i32
  }
  func.func @transform_5(%arg0: i32) -> (i32, i32) {
    %c0_i32 = arith.constant 0 : i32
    %c0_i32_0 = arith.constant 0 : i32
    return %c0_i32, %arg0 : i32, i32
  }
}

</mosaic_0001>

<llo_original>
// kernel: mlp_forward.1
$region0: #{mlp_forward.1}
  #allocation0 [shape = 'u32[]', space=smem, size = 0x4, offset = 0x4, fixed_abs, tag = 'smem constant byte address 0x4 - core index']
  #allocation1 [shape = 'u32[72,128]{1,0:T(1,128)}', space=vmem, size = 0x9000, scoped, tag = 'internal scratch']
  %s0 = inlined_call_operand.vmem [shape: bf16[1024,32], index: 0, kind: input, shape index: {}]
  %s1 = inlined_call_operand.vmem [shape: bf16[64,32], index: 1, kind: input, shape index: {}]
  %s2 = inlined_call_operand.vmem [shape: bf16[128,64], index: 2, kind: input, shape index: {}]
  %s3 = inlined_call_operand.vmem [shape: bf16[16,128], index: 3, kind: input, shape index: {}]
  %s4 = inlined_call_operand.vmem [shape: f32[208,1], index: 4, kind: input, shape index: {}]
  %s5 = inlined_call_operand.hbm [shape: f32[16,1024], index: 5, kind: output, shape index: {}]
  %s6 = sld [smem:[#allocation0]]
  $region30: #{mlp_forward.1} parent=0
    _
  %s8 = ssub.s32 1, %s6
  %s9 = scalar_select 0, %s8, %s6
  $region1: #{mlp_forward.1} parent=0
    #allocation2 [shape = 'u8[65536]{0}', space=vmem, size = 0x10000, scoped, tag = 'output window, operand 0, single buffered']
    #allocation3 [shape = 's32[1]{0}', space=sflag, size = 0x4, scoped, tag = 'scoped memory for mlp_forward.1']
    %10 = vsyncpa [#allocation3], 0
    // Predicated region
    $region2: #{mlp_forward.1} parent=1 // pred_check
      _
    $region3: #{mlp_forward.1} parent=1 // pred_check_branch
      %12 = sbr.rel (0) target = $region5
    $region4: #{mlp_forward.1} parent=1 // pred_region
      _
    $region5: #{mlp_forward.1} parent=1 // pred_fallthru
      _
    // Predicated region
    $region6: #{mlp_forward.1} parent=1 // pred_check
      _
    $region7: #{mlp_forward.1} parent=1 // pred_check_branch
      %14 = sbr.rel (0) target = $region9
    $region8: #{mlp_forward.1} parent=1 // pred_region
      _
    $region9: #{mlp_forward.1} parent=1 // pred_fallthru
      _
    // Predicated region
    $region10: #{mlp_forward.1} parent=1 // pred_check
      _
    $region11: #{mlp_forward.1} parent=1 // pred_check_branch
      %16 = sbr.rel (0) target = $region13
    $region12: #{mlp_forward.1} parent=1 // pred_region
      _
    $region13: #{mlp_forward.1} parent=1 // pred_fallthru
      _
    // Predicated region
    $region14: #{mlp_forward.1} parent=1 // pred_check
      _
    $region15: #{mlp_forward.1} parent=1 // pred_check_branch
      %18 = sbr.rel (0) target = $region17
    $region16: #{mlp_forward.1} parent=1 // pred_region
      _
    $region17: #{mlp_forward.1} parent=1 // pred_fallthru
      _
    // Predicated region
    $region18: #{mlp_forward.1} parent=1 // pred_check
      _
    $region19: #{mlp_forward.1} parent=1 // pred_check_branch
      %20 = sbr.rel (0) target = $region21
    $region20: #{mlp_forward.1} parent=1 // pred_region
      _
    $region21: #{mlp_forward.1} parent=1 // pred_fallthru
      _
    %v22 = vld [vmem:[%s1] sm:$0xf]
    %v23 = vld [vmem:[%s1 + $0x4] sm:$0xf]
    %v24 = vld [vmem:[%s1 + $0x8] sm:$0xf]
    %v25 = vld [vmem:[%s1 + $0xc] sm:$0xf]
    %v26 = vld [vmem:[%s1 + $0x10] sm:$0xf]
    %v27 = vld [vmem:[%s1 + $0x14] sm:$0xf]
    %v28 = vld [vmem:[%s1 + $0x18] sm:$0xf]
    %v29 = vld [vmem:[%s1 + $0x1c] sm:$0xf]
    %v30 = vld [vmem:[%s0] sm:$0xf]
    %v31 = vld [vmem:[%s0 + $0x4] sm:$0xf]
    %v32 = vld [vmem:[%s0 + $0x8] sm:$0xf]
    %v33 = vld [vmem:[%s0 + $0xc] sm:$0xf]
    %v34 = vld [vmem:[%s0 + $0x10] sm:$0xf]
    %v35 = vld [vmem:[%s0 + $0x14] sm:$0xf]
    %v36 = vld [vmem:[%s0 + $0x18] sm:$0xf]
    %v37 = vld [vmem:[%s0 + $0x1c] sm:$0xf]
    %v38 = vld [vmem:[%s0 + $0x20] sm:$0xf]
    %v39 = vld [vmem:[%s0 + $0x24] sm:$0xf]
    %v40 = vld [vmem:[%s0 + $0x28] sm:$0xf]
    %v41 = vld [vmem:[%s0 + $0x2c] sm:$0xf]
    %v42 = vld [vmem:[%s0 + $0x30] sm:$0xf]
    %v43 = vld [vmem:[%s0 + $0x34] sm:$0xf]
    %v44 = vld [vmem:[%s0 + $0x38] sm:$0xf]
    %v45 = vld [vmem:[%s0 + $0x3c] sm:$0xf]
    %v46 = vld [vmem:[%s0 + $0x40] sm:$0xf]
    %v47 = vld [vmem:[%s0 + $0x44] sm:$0xf]
    %v48 = vld [vmem:[%s0 + $0x48] sm:$0xf]
    %v49 = vld [vmem:[%s0 + $0x4c] sm:$0xf]
    %v50 = vld [vmem:[%s0 + $0x50] sm:$0xf]
    %v51 = vld [vmem:[%s0 + $0x54] sm:$0xf]
    %v52 = vld [vmem:[%s0 + $0x58] sm:$0xf]
    %v53 = vld [vmem:[%s0 + $0x5c] sm:$0xf]
    %v54 = vld [vmem:[%s0 + $0x60] sm:$0xf]
    %v55 = vld [vmem:[%s0 + $0x64] sm:$0xf]
    %v56 = vld [vmem:[%s0 + $0x68] sm:$0xf]
    %v57 = vld [vmem:[%s0 + $0x6c] sm:$0xf]
    %v58 = vld [vmem:[%s0 + $0x70] sm:$0xf]
    %v59 = vld [vmem:[%s0 + $0x74] sm:$0xf]
    %v60 = vld [vmem:[%s0 + $0x78] sm:$0xf]
    %v61 = vld [vmem:[%s0 + $0x7c] sm:$0xf]
    %v62 = vld [vmem:[%s0 + $0x80] sm:$0xf]
    %v63 = vld [vmem:[%s0 + $0x84] sm:$0xf]
    %v64 = vld [vmem:[%s0 + $0x88] sm:$0xf]
    %v65 = vld [vmem:[%s0 + $0x8c] sm:$0xf]
    %v66 = vld [vmem:[%s0 + $0x90] sm:$0xf]
    %v67 = vld [vmem:[%s0 + $0x94] sm:$0xf]
    %v68 = vld [vmem:[%s0 + $0x98] sm:$0xf]
    %v69 = vld [vmem:[%s0 + $0x9c] sm:$0xf]
    %v70 = vld [vmem:[%s0 + $0xa0] sm:$0xf]
    %v71 = vld [vmem:[%s0 + $0xa4] sm:$0xf]
    %v72 = vld [vmem:[%s0 + $0xa8] sm:$0xf]
    %v73 = vld [vmem:[%s0 + $0xac] sm:$0xf]
    %v74 = vld [vmem:[%s0 + $0xb0] sm:$0xf]
    %v75 = vld [vmem:[%s0 + $0xb4] sm:$0xf]
    %v76 = vld [vmem:[%s0 + $0xb8] sm:$0xf]
    %v77 = vld [vmem:[%s0 + $0xbc] sm:$0xf]
    %v78 = vld [vmem:[%s0 + $0xc0] sm:$0xf]
    %v79 = vld [vmem:[%s0 + $0xc4] sm:$0xf]
    %v80 = vld [vmem:[%s0 + $0xc8] sm:$0xf]
    %v81 = vld [vmem:[%s0 + $0xcc] sm:$0xf]
    %v82 = vld [vmem:[%s0 + $0xd0] sm:$0xf]
    %v83 = vld [vmem:[%s0 + $0xd4] sm:$0xf]
    %v84 = vld [vmem:[%s0 + $0xd8] sm:$0xf]
    %v85 = vld [vmem:[%s0 + $0xdc] sm:$0xf]
    %v86 = vld [vmem:[%s0 + $0xe0] sm:$0xf]
    %v87 = vld [vmem:[%s0 + $0xe4] sm:$0xf]
    %v88 = vld [vmem:[%s0 + $0xe8] sm:$0xf]
    %v89 = vld [vmem:[%s0 + $0xec] sm:$0xf]
    %v90 = vld [vmem:[%s0 + $0xf0] sm:$0xf]
    %v91 = vld [vmem:[%s0 + $0xf4] sm:$0xf]
    %v92 = vld [vmem:[%s0 + $0xf8] sm:$0xf]
    %v93 = vld [vmem:[%s0 + $0xfc] sm:$0xf]
    %v94 = vld [vmem:[%s0 + $0x100] sm:$0xf]
    %v95 = vld [vmem:[%s0 + $0x104] sm:$0xf]
    %v96 = vld [vmem:[%s0 + $0x108] sm:$0xf]
    %v97 = vld [vmem:[%s0 + $0x10c] sm:$0xf]
    %v98 = vld [vmem:[%s0 + $0x110] sm:$0xf]
    %v99 = vld [vmem:[%s0 + $0x114] sm:$0xf]
    %v100 = vld [vmem:[%s0 + $0x118] sm:$0xf]
    %v101 = vld [vmem:[%s0 + $0x11c] sm:$0xf]
    %v102 = vld [vmem:[%s0 + $0x120] sm:$0xf]
    %v103 = vld [vmem:[%s0 + $0x124] sm:$0xf]
    %v104 = vld [vmem:[%s0 + $0x128] sm:$0xf]
    %v105 = vld [vmem:[%s0 + $0x12c] sm:$0xf]
    %v106 = vld [vmem:[%s0 + $0x130] sm:$0xf]
    %v107 = vld [vmem:[%s0 + $0x134] sm:$0xf]
    %v108 = vld [vmem:[%s0 + $0x138] sm:$0xf]
    %v109 = vld [vmem:[%s0 + $0x13c] sm:$0xf]
    %v110 = vld [vmem:[%s0 + $0x140] sm:$0xf]
    %v111 = vld [vmem:[%s0 + $0x144] sm:$0xf]
    %v112 = vld [vmem:[%s0 + $0x148] sm:$0xf]
    %v113 = vld [vmem:[%s0 + $0x14c] sm:$0xf]
    %v114 = vld [vmem:[%s0 + $0x150] sm:$0xf]
    %v115 = vld [vmem:[%s0 + $0x154] sm:$0xf]
    %v116 = vld [vmem:[%s0 + $0x158] sm:$0xf]
    %v117 = vld [vmem:[%s0 + $0x15c] sm:$0xf]
    %v118 = vld [vmem:[%s0 + $0x160] sm:$0xf]
    %v119 = vld [vmem:[%s0 + $0x164] sm:$0xf]
    %v120 = vld [vmem:[%s0 + $0x168] sm:$0xf]
    %v121 = vld [vmem:[%s0 + $0x16c] sm:$0xf]
    %v122 = vld [vmem:[%s0 + $0x170] sm:$0xf]
    %v123 = vld [vmem:[%s0 + $0x174] sm:$0xf]
    %v124 = vld [vmem:[%s0 + $0x178] sm:$0xf]
    %v125 = vld [vmem:[%s0 + $0x17c] sm:$0xf]
    %v126 = vld [vmem:[%s0 + $0x180] sm:$0xf]
    %v127 = vld [vmem:[%s0 + $0x184] sm:$0xf]
    %v128 = vld [vmem:[%s0 + $0x188] sm:$0xf]
    %v129 = vld [vmem:[%s0 + $0x18c] sm:$0xf]
    %v130 = vld [vmem:[%s0 + $0x190] sm:$0xf]
    %v131 = vld [vmem:[%s0 + $0x194] sm:$0xf]
    %v132 = vld [vmem:[%s0 + $0x198] sm:$0xf]
    %v133 = vld [vmem:[%s0 + $0x19c] sm:$0xf]
    %v134 = vld [vmem:[%s0 + $0x1a0] sm:$0xf]
    %v135 = vld [vmem:[%s0 + $0x1a4] sm:$0xf]
    %v136 = vld [vmem:[%s0 + $0x1a8] sm:$0xf]
    %v137 = vld [vmem:[%s0 + $0x1ac] sm:$0xf]
    %v138 = vld [vmem:[%s0 + $0x1b0] sm:$0xf]
    %v139 = vld [vmem:[%s0 + $0x1b4] sm:$0xf]
    %v140 = vld [vmem:[%s0 + $0x1b8] sm:$0xf]
    %v141 = vld [vmem:[%s0 + $0x1bc] sm:$0xf]
    %v142 = vld [vmem:[%s0 + $0x1c0] sm:$0xf]
    %v143 = vld [vmem:[%s0 + $0x1c4] sm:$0xf]
    %v144 = vld [vmem:[%s0 + $0x1c8] sm:$0xf]
    %v145 = vld [vmem:[%s0 + $0x1cc] sm:$0xf]
    %v146 = vld [vmem:[%s0 + $0x1d0] sm:$0xf]
    %v147 = vld [vmem:[%s0 + $0x1d4] sm:$0xf]
    %v148 = vld [vmem:[%s0 + $0x1d8] sm:$0xf]
    %v149 = vld [vmem:[%s0 + $0x1dc] sm:$0xf]
    %v150 = vld [vmem:[%s0 + $0x1e0] sm:$0xf]
    %v151 = vld [vmem:[%s0 + $0x1e4] sm:$0xf]
    %v152 = vld [vmem:[%s0 + $0x1e8] sm:$0xf]
    %v153 = vld [vmem:[%s0 + $0x1ec] sm:$0xf]
    %v154 = vld [vmem:[%s0 + $0x1f0] sm:$0xf]
    %v155 = vld [vmem:[%s0 + $0x1f4] sm:$0xf]
    %v156 = vld [vmem:[%s0 + $0x1f8] sm:$0xf]
    %v157 = vld [vmem:[%s0 + $0x1fc] sm:$0xf]
    %v158 = vld [vmem:[%s4] sm:$0xff]
    %v159 = vld [vmem:[%s4 + $0x8] sm:$0xff]
    %v160 = vld [vmem:[%s4 + $0x10] sm:$0xff]
    %v161 = vld [vmem:[%s4 + $0x18] sm:$0xff]
    %v162 = vld [vmem:[%s4 + $0x20] sm:$0xff]
    %v163 = vld [vmem:[%s4 + $0x28] sm:$0xff]
    %v164 = vld [vmem:[%s4 + $0x30] sm:$0xff]
    %v165 = vld [vmem:[%s4 + $0x38] sm:$0xff]
    %167 = vset.pattern.permute.xlu0 0
    %168 = vperm.xlu0 %167, %v158
    %v169 = vpop.permute.xlu0 %168
    %172 = vset.pattern.permute.xlu0 0
    %173 = vperm.xlu0 %172, %v159
    %v174 = vpop.permute.xlu0 %173
    %177 = vset.pattern.permute.xlu0 0
    %178 = vperm.xlu0 %177, %v160
    %v179 = vpop.permute.xlu0 %178
    %182 = vset.pattern.permute.xlu0 0
    %183 = vperm.xlu0 %182, %v161
    %v184 = vpop.permute.xlu0 %183
    %187 = vset.pattern.permute.xlu0 0
    %188 = vperm.xlu0 %187, %v162
    %v189 = vpop.permute.xlu0 %188
    %192 = vset.pattern.permute.xlu0 0
    %193 = vperm.xlu0 %192, %v163
    %v194 = vpop.permute.xlu0 %193
    %197 = vset.pattern.permute.xlu0 0
    %198 = vperm.xlu0 %197, %v164
    %v199 = vpop.permute.xlu0 %198
    %202 = vset.pattern.permute.xlu0 0
    %203 = vperm.xlu0 %202, %v165
    %v204 = vpop.permute.xlu0 %203
    %v214 = vunpack.c.l.b16 %v22
    %v215 = vunpack.c.l.b16 %v23
    %v216 = vunpack.c.l.b16 %v24
    %v217 = vunpack.c.l.b16 %v25
    %v218 = vunpack.c.l.b16 %v26
    %v219 = vunpack.c.l.b16 %v27
    %v220 = vunpack.c.l.b16 %v28
    %v221 = vunpack.c.l.b16 %v29
    %v222 = vpack.c.b16 %v215, %v214
    %v223 = vpack.c.b16 %v217, %v216
    %v224 = vpack.c.b16 %v219, %v218
    %v225 = vpack.c.b16 %v221, %v220
    %v354 = vunpack.c.l.b16 %v30
    %v355 = vunpack.c.l.b16 %v31
    %v356 = vunpack.c.l.b16 %v32
    %v357 = vunpack.c.l.b16 %v33
    %v358 = vunpack.c.l.b16 %v34
    %v359 = vunpack.c.l.b16 %v35
    %v360 = vunpack.c.l.b16 %v36
    %v361 = vunpack.c.l.b16 %v37
    %v362 = vunpack.c.l.b16 %v38
    %v363 = vunpack.c.l.b16 %v39
    %v364 = vunpack.c.l.b16 %v40
    %v365 = vunpack.c.l.b16 %v41
    %v366 = vunpack.c.l.b16 %v42
    %v367 = vunpack.c.l.b16 %v43
    %v368 = vunpack.c.l.b16 %v44
    %v369 = vunpack.c.l.b16 %v45
    %v370 = vunpack.c.l.b16 %v46
    %v371 = vunpack.c.l.b16 %v47
    %v372 = vunpack.c.l.b16 %v48
    %v373 = vunpack.c.l.b16 %v49
    %v374 = vunpack.c.l.b16 %v50
    %v375 = vunpack.c.l.b16 %v51
    %v376 = vunpack.c.l.b16 %v52
    %v377 = vunpack.c.l.b16 %v53
    %v378 = vunpack.c.l.b16 %v54
    %v379 = vunpack.c.l.b16 %v55
    %v380 = vunpack.c.l.b16 %v56
    %v381 = vunpack.c.l.b16 %v57
    %v382 = vunpack.c.l.b16 %v58
    %v383 = vunpack.c.l.b16 %v59
    %v384 = vunpack.c.l.b16 %v60
    %v385 = vunpack.c.l.b16 %v61
    %v386 = vunpack.c.l.b16 %v62
    %v387 = vunpack.c.l.b16 %v63
    %v388 = vunpack.c.l.b16 %v64
    %v389 = vunpack.c.l.b16 %v65
    %v390 = vunpack.c.l.b16 %v66
    %v391 = vunpack.c.l.b16 %v67
    %v392 = vunpack.c.l.b16 %v68
    %v393 = vunpack.c.l.b16 %v69
    %v394 = vunpack.c.l.b16 %v70
    %v395 = vunpack.c.l.b16 %v71
    %v396 = vunpack.c.l.b16 %v72
    %v397 = vunpack.c.l.b16 %v73
    %v398 = vunpack.c.l.b16 %v74
    %v399 = vunpack.c.l.b16 %v75
    %v400 = vunpack.c.l.b16 %v76
    %v401 = vunpack.c.l.b16 %v77
    %v402 = vunpack.c.l.b16 %v78
    %v403 = vunpack.c.l.b16 %v79
    %v404 = vunpack.c.l.b16 %v80
    %v405 = vunpack.c.l.b16 %v81
    %v406 = vunpack.c.l.b16 %v82
    %v407 = vunpack.c.l.b16 %v83
    %v408 = vunpack.c.l.b16 %v84
    %v409 = vunpack.c.l.b16 %v85
    %v410 = vunpack.c.l.b16 %v86
    %v411 = vunpack.c.l.b16 %v87
    %v412 = vunpack.c.l.b16 %v88
    %v413 = vunpack.c.l.b16 %v89
    %v414 = vunpack.c.l.b16 %v90
    %v415 = vunpack.c.l.b16 %v91
    %v416 = vunpack.c.l.b16 %v92
    %v417 = vunpack.c.l.b16 %v93
    %v418 = vunpack.c.l.b16 %v94
    %v419 = vunpack.c.l.b16 %v95
    %v420 = vunpack.c.l.b16 %v96
    %v421 = vunpack.c.l.b16 %v97
    %v422 = vunpack.c.l.b16 %v98
    %v423 = vunpack.c.l.b16 %v99
    %v424 = vunpack.c.l.b16 %v100
    %v425 = vunpack.c.l.b16 %v101
    %v426 = vunpack.c.l.b16 %v102
    %v427 = vunpack.c.l.b16 %v103
    %v428 = vunpack.c.l.b16 %v104
    %v429 = vunpack.c.l.b16 %v105
    %v430 = vunpack.c.l.b16 %v106
    %v431 = vunpack.c.l.b16 %v107
    %v432 = vunpack.c.l.b16 %v108
    %v433 = vunpack.c.l.b16 %v109
    %v434 = vunpack.c.l.b16 %v110
    %v435 = vunpack.c.l.b16 %v111
    %v436 = vunpack.c.l.b16 %v112
    %v437 = vunpack.c.l.b16 %v113
    %v438 = vunpack.c.l.b16 %v114
    %v439 = vunpack.c.l.b16 %v115
    %v440 = vunpack.c.l.b16 %v116
    %v441 = vunpack.c.l.b16 %v117
    %v442 = vunpack.c.l.b16 %v118
    %v443 = vunpack.c.l.b16 %v119
    %v444 = vunpack.c.l.b16 %v120
    %v445 = vunpack.c.l.b16 %v121
    %v446 = vunpack.c.l.b16 %v122
    %v447 = vunpack.c.l.b16 %v123
    %v448 = vunpack.c.l.b16 %v124
    %v449 = vunpack.c.l.b16 %v125
    %v450 = vunpack.c.l.b16 %v126
    %v451 = vunpack.c.l.b16 %v127
    %v452 = vunpack.c.l.b16 %v128
    %v453 = vunpack.c.l.b16 %v129
    %v454 = vunpack.c.l.b16 %v130
    %v455 = vunpack.c.l.b16 %v131
    %v456 = vunpack.c.l.b16 %v132
    %v457 = vunpack.c.l.b16 %v133
    %v458 = vunpack.c.l.b16 %v134
    %v459 = vunpack.c.l.b16 %v135
    %v460 = vunpack.c.l.b16 %v136
    %v461 = vunpack.c.l.b16 %v137
    %v462 = vunpack.c.l.b16 %v138
    %v463 = vunpack.c.l.b16 %v139
    %v464 = vunpack.c.l.b16 %v140
    %v465 = vunpack.c.l.b16 %v141
    %v466 = vunpack.c.l.b16 %v142
    %v467 = vunpack.c.l.b16 %v143
    %v468 = vunpack.c.l.b16 %v144
    %v469 = vunpack.c.l.b16 %v145
    %v470 = vunpack.c.l.b16 %v146
    %v471 = vunpack.c.l.b16 %v147
    %v472 = vunpack.c.l.b16 %v148
    %v473 = vunpack.c.l.b16 %v149
    %v474 = vunpack.c.l.b16 %v150
    %v475 = vunpack.c.l.b16 %v151
    %v476 = vunpack.c.l.b16 %v152
    %v477 = vunpack.c.l.b16 %v153
    %v478 = vunpack.c.l.b16 %v154
    %v479 = vunpack.c.l.b16 %v155
    %v480 = vunpack.c.l.b16 %v156
    %v481 = vunpack.c.l.b16 %v157
    %v482 = vpack.c.b16 %v355, %v354
    %v483 = vpack.c.b16 %v357, %v356
    %v484 = vpack.c.b16 %v359, %v358
    %v485 = vpack.c.b16 %v361, %v360
    %v486 = vpack.c.b16 %v363, %v362
    %v487 = vpack.c.b16 %v365, %v364
    %v488 = vpack.c.b16 %v367, %v366
    %v489 = vpack.c.b16 %v369, %v368
    %v490 = vpack.c.b16 %v371, %v370
    %v491 = vpack.c.b16 %v373, %v372
    %v492 = vpack.c.b16 %v375, %v374
    %v493 = vpack.c.b16 %v377, %v376
    %v494 = vpack.c.b16 %v379, %v378
    %v495 = vpack.c.b16 %v381, %v380
    %v496 = vpack.c.b16 %v383, %v382
    %v497 = vpack.c.b16 %v385, %v384
    %v498 = vpack.c.b16 %v387, %v386
    %v499 = vpack.c.b16 %v389, %v388
    %v500 = vpack.c.b16 %v391, %v390
    %v501 = vpack.c.b16 %v393, %v392
    %v502 = vpack.c.b16 %v395, %v394
    %v503 = vpack.c.b16 %v397, %v396
    %v504 = vpack.c.b16 %v399, %v398
    %v505 = vpack.c.b16 %v401, %v400
    %v506 = vpack.c.b16 %v403, %v402
    %v507 = vpack.c.b16 %v405, %v404
    %v508 = vpack.c.b16 %v407, %v406
    %v509 = vpack.c.b16 %v409, %v408
    %v510 = vpack.c.b16 %v411, %v410
    %v511 = vpack.c.b16 %v413, %v412
    %v512 = vpack.c.b16 %v415, %v414
    %v513 = vpack.c.b16 %v417, %v416
    %v514 = vpack.c.b16 %v419, %v418
    %v515 = vpack.c.b16 %v421, %v420
    %v516 = vpack.c.b16 %v423, %v422
    %v517 = vpack.c.b16 %v425, %v424
    %v518 = vpack.c.b16 %v427, %v426
    %v519 = vpack.c.b16 %v429, %v428
    %v520 = vpack.c.b16 %v431, %v430
    %v521 = vpack.c.b16 %v433, %v432
    %v522 = vpack.c.b16 %v435, %v434
    %v523 = vpack.c.b16 %v437, %v436
    %v524 = vpack.c.b16 %v439, %v438
    %v525 = vpack.c.b16 %v441, %v440
    %v526 = vpack.c.b16 %v443, %v442
    %v527 = vpack.c.b16 %v445, %v444
    %v528 = vpack.c.b16 %v447, %v446
    %v529 = vpack.c.b16 %v449, %v448
    %v530 = vpack.c.b16 %v451, %v450
    %v531 = vpack.c.b16 %v453, %v452
    %v532 = vpack.c.b16 %v455, %v454
    %v533 = vpack.c.b16 %v457, %v456
    %v534 = vpack.c.b16 %v459, %v458
    %v535 = vpack.c.b16 %v461, %v460
    %v536 = vpack.c.b16 %v463, %v462
    %v537 = vpack.c.b16 %v465, %v464
    %v538 = vpack.c.b16 %v467, %v466
    %v539 = vpack.c.b16 %v469, %v468
    %v540 = vpack.c.b16 %v471, %v470
    %v541 = vpack.c.b16 %v473, %v472
    %v542 = vpack.c.b16 %v475, %v474
    %v543 = vpack.c.b16 %v477, %v476
    %v544 = vpack.c.b16 %v479, %v478
    %v545 = vpack.c.b16 %v481, %v480
    %vm546 = vcmask 261120
    %v548 = vsel %vm546, %v222, 0
    %v551 = vsel %vm546, %v223, 0
    %v554 = vsel %vm546, %v224, 0
    %v557 = vsel %vm546, %v225, 0
    %v560 = vsel %vm546, %v482, 0
    %v563 = vsel %vm546, %v483, 0
    %v566 = vsel %vm546, %v484, 0
    %v569 = vsel %vm546, %v485, 0
    %v572 = vsel %vm546, %v486, 0
    %v575 = vsel %vm546, %v487, 0
    %v578 = vsel %vm546, %v488, 0
    %v581 = vsel %vm546, %v489, 0
    %v584 = vsel %vm546, %v490, 0
    %v587 = vsel %vm546, %v491, 0
    %v590 = vsel %vm546, %v492, 0
    %v593 = vsel %vm546, %v493, 0
    %v596 = vsel %vm546, %v494, 0
    %v599 = vsel %vm546, %v495, 0
    %v602 = vsel %vm546, %v496, 0
    %v605 = vsel %vm546, %v497, 0
    %v608 = vsel %vm546, %v498, 0
    %v611 = vsel %vm546, %v499, 0
    %v614 = vsel %vm546, %v500, 0
    %v617 = vsel %vm546, %v501, 0
    %v620 = vsel %vm546, %v502, 0
    %v623 = vsel %vm546, %v503, 0
    %v626 = vsel %vm546, %v504, 0
    %v629 = vsel %vm546, %v505, 0
    %v632 = vsel %vm546, %v506, 0
    %v635 = vsel %vm546, %v507, 0
    %v638 = vsel %vm546, %v508, 0
    %v641 = vsel %vm546, %v509, 0
    %v644 = vsel %vm546, %v510, 0
    %v647 = vsel %vm546, %v511, 0
    %v650 = vsel %vm546, %v512, 0
    %v653 = vsel %vm546, %v513, 0
    %v656 = vsel %vm546, %v514, 0
    %v659 = vsel %vm546, %v515, 0
    %v662 = vsel %vm546, %v516, 0
    %v665 = vsel %vm546, %v517, 0
    %v668 = vsel %vm546, %v518, 0
    %v671 = vsel %vm546, %v519, 0
    %v674 = vsel %vm546, %v520, 0
    %v677 = vsel %vm546, %v521, 0
    %v680 = vsel %vm546, %v522, 0
    %v683 = vsel %vm546, %v523, 0
    %v686 = vsel %vm546, %v524, 0
    %v689 = vsel %vm546, %v525, 0
    %v692 = vsel %vm546, %v526, 0
    %v695 = vsel %vm546, %v527, 0
    %v698 = vsel %vm546, %v528, 0
    %v701 = vsel %vm546, %v529, 0
    %v704 = vsel %vm546, %v530, 0
    %v707 = vsel %vm546, %v531, 0
    %v710 = vsel %vm546, %v532, 0
    %v713 = vsel %vm546, %v533, 0
    %v716 = vsel %vm546, %v534, 0
    %v719 = vsel %vm546, %v535, 0
    %v722 = vsel %vm546, %v536, 0
    %v725 = vsel %vm546, %v537, 0
    %v728 = vsel %vm546, %v538, 0
    %v731 = vsel %vm546, %v539, 0
    %v734 = vsel %vm546, %v540, 0
    %v737 = vsel %vm546, %v541, 0
    %v740 = vsel %vm546, %v542, 0
    %v743 = vsel %vm546, %v543, 0
    %v746 = vsel %vm546, %v544, 0
    %v749 = vsel %vm546, %v545, 0
    %751 = vmatpush.bf16.xpose.msra.mxu0 %v581
    %752 = vmatpush.bf16.xpose.msra.mxu0 %v578
    %753 = vmatpush.bf16.xpose.msra.mxu0 %v575
    %754 = vmatpush.bf16.xpose.msra.mxu0 %v572
    %755 = vmatpush.bf16.xpose.msra.mxu0 %v569
    %756 = vmatpush.bf16.xpose.msra.mxu0 %v566
    %757 = vmatpush.bf16.xpose.msra.mxu0 %v563
    %758 = vmatpush.bf16.xpose.msra.mxu0 %v560
    %759 = vmatmul.bf16.gmra.mxu0 %v548
    %v760 = vpop.f32.mrf.mxu0
    %v761 = vadd.f32 %v169, %v760
    %v762 = vpop.f32.mrf.mxu0
    %v763 = vadd.f32 %v174, %v762
    %764 = vmatmul.bf16.gmra.mxu0 %v551
    %v765 = vpop.f32.mrf.mxu0
    %v766 = vadd.f32 %v179, %v765
    %v767 = vpop.f32.mrf.mxu0
    %v768 = vadd.f32 %v184, %v767
    %769 = vmatmul.bf16.gmra.mxu0 %v554
    %v770 = vpop.f32.mrf.mxu0
    %v771 = vadd.f32 %v189, %v770
    %v772 = vpop.f32.mrf.mxu0
    %v773 = vadd.f32 %v194, %v772
    %774 = vmatmul.bf16.gmra.mxu0 %v557
    %v775 = vpop.f32.mrf.mxu0
    %v776 = vadd.f32 %v199, %v775
    %v777 = vpop.f32.mrf.mxu0
    %v778 = vadd.f32 %v204, %v777
    %779 = vdwg.mxu0
    %780 = vmatpush.bf16.xpose.msra.mxu0 %v605
    %781 = vmatpush.bf16.xpose.msra.mxu0 %v602
    %782 = vmatpush.bf16.xpose.msra.mxu0 %v599
    %783 = vmatpush.bf16.xpose.msra.mxu0 %v596
    %784 = vmatpush.bf16.xpose.msra.mxu0 %v593
    %785 = vmatpush.bf16.xpose.msra.mxu0 %v590
    %786 = vmatpush.bf16.xpose.msra.mxu0 %v587
    %787 = vmatpush.bf16.xpose.msra.mxu0 %v584
    %788 = vmatmul.bf16.gmra.mxu0 %v548
    %v789 = vpop.f32.mrf.mxu0
    %v790 = vadd.f32 %v169, %v789
    %v791 = vpop.f32.mrf.mxu0
    %v792 = vadd.f32 %v174, %v791
    %793 = vmatmul.bf16.gmra.mxu0 %v551
    %v794 = vpop.f32.mrf.mxu0
    %v795 = vadd.f32 %v179, %v794
    %v796 = vpop.f32.mrf.mxu0
    %v797 = vadd.f32 %v184, %v796
    %798 = vmatmul.bf16.gmra.mxu0 %v554
    %v799 = vpop.f32.mrf.mxu0
    %v800 = vadd.f32 %v189, %v799
    %v801 = vpop.f32.mrf.mxu0
    %v802 = vadd.f32 %v194, %v801
    %803 = vmatmul.bf16.gmra.mxu0 %v557
    %v804 = vpop.f32.mrf.mxu0
    %v805 = vadd.f32 %v199, %v804
    %v806 = vpop.f32.mrf.mxu0
    %v807 = vadd.f32 %v204, %v806
    %808 = vdwg.mxu0
    %809 = vmatpush.bf16.xpose.msra.mxu0 %v629
    %810 = vmatpush.bf16.xpose.msra.mxu0 %v626
    %811 = vmatpush.bf16.xpose.msra.mxu0 %v623
    %812 = vmatpush.bf16.xpose.msra.mxu0 %v620
    %813 = vmatpush.bf16.xpose.msra.mxu0 %v617
    %814 = vmatpush.bf16.xpose.msra.mxu0 %v614
    %815 = vmatpush.bf16.xpose.msra.mxu0 %v611
    %816 = vmatpush.bf16.xpose.msra.mxu0 %v608
    %817 = vmatmul.bf16.gmra.mxu0 %v548
    %v818 = vpop.f32.mrf.mxu0
    %v819 = vadd.f32 %v169, %v818
    %v820 = vpop.f32.mrf.mxu0
    %v821 = vadd.f32 %v174, %v820
    %822 = vmatmul.bf16.gmra.mxu0 %v551
    %v823 = vpop.f32.mrf.mxu0
    %v824 = vadd.f32 %v179, %v823
    %v825 = vpop.f32.mrf.mxu0
    %v826 = vadd.f32 %v184, %v825
    %827 = vmatmul.bf16.gmra.mxu0 %v554
    %v828 = vpop.f32.mrf.mxu0
    %v829 = vadd.f32 %v189, %v828
    %v830 = vpop.f32.mrf.mxu0
    %v831 = vadd.f32 %v194, %v830
    %832 = vmatmul.bf16.gmra.mxu0 %v557
    %v833 = vpop.f32.mrf.mxu0
    %v834 = vadd.f32 %v199, %v833
    %v835 = vpop.f32.mrf.mxu0
    %v836 = vadd.f32 %v204, %v835
    %837 = vdwg.mxu0
    %838 = vmatpush.bf16.xpose.msra.mxu0 %v653
    %839 = vmatpush.bf16.xpose.msra.mxu0 %v650
    %840 = vmatpush.bf16.xpose.msra.mxu0 %v647
    %841 = vmatpush.bf16.xpose.msra.mxu0 %v644
    %842 = vmatpush.bf16.xpose.msra.mxu0 %v641
    %843 = vmatpush.bf16.xpose.msra.mxu0 %v638
    %844 = vmatpush.bf16.xpose.msra.mxu0 %v635
    %845 = vmatpush.bf16.xpose.msra.mxu0 %v632
    %846 = vmatmul.bf16.gmra.mxu0 %v548
    %v847 = vpop.f32.mrf.mxu0
    %v848 = vadd.f32 %v169, %v847
    %v849 = vpop.f32.mrf.mxu0
    %v850 = vadd.f32 %v174, %v849
    %851 = vmatmul.bf16.gmra.mxu0 %v551
    %v852 = vpop.f32.mrf.mxu0
    %v853 = vadd.f32 %v179, %v852
    %v854 = vpop.f32.mrf.mxu0
    %v855 = vadd.f32 %v184, %v854
    %856 = vmatmul.bf16.gmra.mxu0 %v554
    %v857 = vpop.f32.mrf.mxu0
    %v858 = vadd.f32 %v189, %v857
    %v859 = vpop.f32.mrf.mxu0
    %v860 = vadd.f32 %v194, %v859
    %861 = vmatmul.bf16.gmra.mxu0 %v557
    %v862 = vpop.f32.mrf.mxu0
    %v863 = vadd.f32 %v199, %v862
    %v864 = vpop.f32.mrf.mxu0
    %v865 = vadd.f32 %v204, %v864
    %866 = vdwg.mxu0
    %867 = vmatpush.bf16.xpose.msra.mxu0 %v677
    %868 = vmatpush.bf16.xpose.msra.mxu0 %v674
    %869 = vmatpush.bf16.xpose.msra.mxu0 %v671
    %870 = vmatpush.bf16.xpose.msra.mxu0 %v668
    %871 = vmatpush.bf16.xpose.msra.mxu0 %v665
    %872 = vmatpush.bf16.xpose.msra.mxu0 %v662
    %873 = vmatpush.bf16.xpose.msra.mxu0 %v659
    %874 = vmatpush.bf16.xpose.msra.mxu0 %v656
    %875 = vmatmul.bf16.gmra.mxu0 %v548
    %v876 = vpop.f32.mrf.mxu0
    %v877 = vadd.f32 %v169, %v876
    %v878 = vpop.f32.mrf.mxu0
    %v879 = vadd.f32 %v174, %v878
    %880 = vmatmul.bf16.gmra.mxu0 %v551
    %v881 = vpop.f32.mrf.mxu0
    %v882 = vadd.f32 %v179, %v881
    %v883 = vpop.f32.mrf.mxu0
    %v884 = vadd.f32 %v184, %v883
    %885 = vmatmul.bf16.gmra.mxu0 %v554
    %v886 = vpop.f32.mrf.mxu0
    %v887 = vadd.f32 %v189, %v886
    %v888 = vpop.f32.mrf.mxu0
    %v889 = vadd.f32 %v194, %v888
    %890 = vmatmul.bf16.gmra.mxu0 %v557
    %v891 = vpop.f32.mrf.mxu0
    %v892 = vadd.f32 %v199, %v891
    %v893 = vpop.f32.mrf.mxu0
    %v894 = vadd.f32 %v204, %v893
    %895 = vdwg.mxu0
    %896 = vmatpush.bf16.xpose.msra.mxu0 %v701
    %897 = vmatpush.bf16.xpose.msra.mxu0 %v698
    %898 = vmatpush.bf16.xpose.msra.mxu0 %v695
    %899 = vmatpush.bf16.xpose.msra.mxu0 %v692
    %900 = vmatpush.bf16.xpose.msra.mxu0 %v689
    %901 = vmatpush.bf16.xpose.msra.mxu0 %v686
    %902 = vmatpush.bf16.xpose.msra.mxu0 %v683
    %903 = vmatpush.bf16.xpose.msra.mxu0 %v680
    %904 = vmatmul.bf16.gmra.mxu0 %v548
    %v905 = vpop.f32.mrf.mxu0
    %v906 = vadd.f32 %v169, %v905
    %v907 = vpop.f32.mrf.mxu0
    %v908 = vadd.f32 %v174, %v907
    %909 = vmatmul.bf16.gmra.mxu0 %v551
    %v910 = vpop.f32.mrf.mxu0
    %v911 = vadd.f32 %v179, %v910
    %v912 = vpop.f32.mrf.mxu0
    %v913 = vadd.f32 %v184, %v912
    %914 = vmatmul.bf16.gmra.mxu0 %v554
    %v915 = vpop.f32.mrf.mxu0
    %v916 = vadd.f32 %v189, %v915
    %v917 = vpop.f32.mrf.mxu0
    %v918 = vadd.f32 %v194, %v917
    %919 = vmatmul.bf16.gmra.mxu0 %v557
    %v920 = vpop.f32.mrf.mxu0
    %v921 = vadd.f32 %v199, %v920
    %v922 = vpop.f32.mrf.mxu0
    %v923 = vadd.f32 %v204, %v922
    %924 = vdwg.mxu0
    %925 = vmatpush.bf16.xpose.msra.mxu0 %v725
    %926 = vmatpush.bf16.xpose.msra.mxu0 %v722
    %927 = vmatpush.bf16.xpose.msra.mxu0 %v719
    %928 = vmatpush.bf16.xpose.msra.mxu0 %v716
    %929 = vmatpush.bf16.xpose.msra.mxu0 %v713
    %930 = vmatpush.bf16.xpose.msra.mxu0 %v710
    %931 = vmatpush.bf16.xpose.msra.mxu0 %v707
    %932 = vmatpush.bf16.xpose.msra.mxu0 %v704
    %933 = vmatmul.bf16.gmra.mxu0 %v548
    %v934 = vpop.f32.mrf.mxu0
    %v935 = vadd.f32 %v169, %v934
    %v936 = vpop.f32.mrf.mxu0
    %v937 = vadd.f32 %v174, %v936
    %938 = vmatmul.bf16.gmra.mxu0 %v551
    %v939 = vpop.f32.mrf.mxu0
    %v940 = vadd.f32 %v179, %v939
    %v941 = vpop.f32.mrf.mxu0
    %v942 = vadd.f32 %v184, %v941
    %943 = vmatmul.bf16.gmra.mxu0 %v554
    %v944 = vpop.f32.mrf.mxu0
    %v945 = vadd.f32 %v189, %v944
    %v946 = vpop.f32.mrf.mxu0
    %v947 = vadd.f32 %v194, %v946
    %948 = vmatmul.bf16.gmra.mxu0 %v557
    %v949 = vpop.f32.mrf.mxu0
    %v950 = vadd.f32 %v199, %v949
    %v951 = vpop.f32.mrf.mxu0
    %v952 = vadd.f32 %v204, %v951
    %953 = vdwg.mxu0
    %954 = vmatpush.bf16.xpose.msra.mxu0 %v749
    %955 = vmatpush.bf16.xpose.msra.mxu0 %v746
    %956 = vmatpush.bf16.xpose.msra.mxu0 %v743
    %957 = vmatpush.bf16.xpose.msra.mxu0 %v740
    %958 = vmatpush.bf16.xpose.msra.mxu0 %v737
    %959 = vmatpush.bf16.xpose.msra.mxu0 %v734
    %960 = vmatpush.bf16.xpose.msra.mxu0 %v731
    %961 = vmatpush.bf16.xpose.msra.mxu0 %v728
    %962 = vmatmul.bf16.gmra.mxu0 %v548
    %v963 = vpop.f32.mrf.mxu0
    %v964 = vadd.f32 %v169, %v963
    %v965 = vpop.f32.mrf.mxu0
    %v966 = vadd.f32 %v174, %v965
    %967 = vmatmul.bf16.gmra.mxu0 %v551
    %v968 = vpop.f32.mrf.mxu0
    %v969 = vadd.f32 %v179, %v968
    %v970 = vpop.f32.mrf.mxu0
    %v971 = vadd.f32 %v184, %v970
    %972 = vmatmul.bf16.gmra.mxu0 %v554
    %v973 = vpop.f32.mrf.mxu0
    %v974 = vadd.f32 %v189, %v973
    %v975 = vpop.f32.mrf.mxu0
    %v976 = vadd.f32 %v194, %v975
    %977 = vmatmul.bf16.gmra.mxu0 %v557
    %v978 = vpop.f32.mrf.mxu0
    %v979 = vadd.f32 %v199, %v978
    %v980 = vpop.f32.mrf.mxu0
    %v981 = vadd.f32 %v204, %v980
    %982 = vdwg.mxu0
    %v983 = vmax.f32 %v761, 0.0
    %v984 = vmax.f32 %v790, 0.0
    %v985 = vmax.f32 %v819, 0.0
    %v986 = vmax.f32 %v848, 0.0
    %v987 = vmax.f32 %v877, 0.0
    %v988 = vmax.f32 %v906, 0.0
    %v989 = vmax.f32 %v935, 0.0
    %v990 = vmax.f32 %v964, 0.0
    %v991 = vmax.f32 %v763, 0.0
    %v992 = vmax.f32 %v792, 0.0
    %v993 = vmax.f32 %v821, 0.0
    %v994 = vmax.f32 %v850, 0.0
    %v995 = vmax.f32 %v879, 0.0
    %v996 = vmax.f32 %v908, 0.0
    %v997 = vmax.f32 %v937, 0.0
    %v998 = vmax.f32 %v966, 0.0
    %v999 = vmax.f32 %v766, 0.0
    %v1000 = vmax.f32 %v795, 0.0
    %v1001 = vmax.f32 %v824, 0.0
    %v1002 = vmax.f32 %v853, 0.0
    %v1003 = vmax.f32 %v882, 0.0
    %v1004 = vmax.f32 %v911, 0.0
    %v1005 = vmax.f32 %v940, 0.0
    %v1006 = vmax.f32 %v969, 0.0
    %v1007 = vmax.f32 %v768, 0.0
    %v1008 = vmax.f32 %v797, 0.0
    %v1009 = vmax.f32 %v826, 0.0
    %v1010 = vmax.f32 %v855, 0.0
    %v1011 = vmax.f32 %v884, 0.0
    %v1012 = vmax.f32 %v913, 0.0
    %v1013 = vmax.f32 %v942, 0.0
    %v1014 = vmax.f32 %v971, 0.0
    %v1015 = vmax.f32 %v771, 0.0
    %v1016 = vmax.f32 %v800, 0.0
    %v1017 = vmax.f32 %v829, 0.0
    %v1018 = vmax.f32 %v858, 0.0
    %v1019 = vmax.f32 %v887, 0.0
    %v1020 = vmax.f32 %v916, 0.0
    %v1021 = vmax.f32 %v945, 0.0
    %v1022 = vmax.f32 %v974, 0.0
    %v1023 = vmax.f32 %v773, 0.0
    %v1024 = vmax.f32 %v802, 0.0
    %v1025 = vmax.f32 %v831, 0.0
    %v1026 = vmax.f32 %v860, 0.0
    %v1027 = vmax.f32 %v889, 0.0
    %v1028 = vmax.f32 %v918, 0.0
    %v1029 = vmax.f32 %v947, 0.0
    %v1030 = vmax.f32 %v976, 0.0
    %v1031 = vmax.f32 %v776, 0.0
    %v1032 = vmax.f32 %v805, 0.0
    %v1033 = vmax.f32 %v834, 0.0
    %v1034 = vmax.f32 %v863, 0.0
    %v1035 = vmax.f32 %v892, 0.0
    %v1036 = vmax.f32 %v921, 0.0
    %v1037 = vmax.f32 %v950, 0.0
    %v1038 = vmax.f32 %v979, 0.0
    %v1039 = vmax.f32 %v778, 0.0
    %v1040 = vmax.f32 %v807, 0.0
    %v1041 = vmax.f32 %v836, 0.0
    %v1042 = vmax.f32 %v865, 0.0
    %v1043 = vmax.f32 %v894, 0.0
    %v1044 = vmax.f32 %v923, 0.0
    %v1045 = vmax.f32 %v952, 0.0
    %v1046 = vmax.f32 %v981, 0.0
    %v1047 = vld [vmem:[%s2] sm:$0xf]
    %v1048 = vld [vmem:[%s2 + $0x4] sm:$0xf]
    %v1049 = vld [vmem:[%s2 + $0x8] sm:$0xf]
    %v1050 = vld [vmem:[%s2 + $0xc] sm:$0xf]
    %v1051 = vld [vmem:[%s2 + $0x10] sm:$0xf]
    %v1052 = vld [vmem:[%s2 + $0x14] sm:$0xf]
    %v1053 = vld [vmem:[%s2 + $0x18] sm:$0xf]
    %v1054 = vld [vmem:[%s2 + $0x1c] sm:$0xf]
    %v1055 = vld [vmem:[%s2 + $0x20] sm:$0xf]
    %v1056 = vld [vmem:[%s2 + $0x24] sm:$0xf]
    %v1057 = vld [vmem:[%s2 + $0x28] sm:$0xf]
    %v1058 = vld [vmem:[%s2 + $0x2c] sm:$0xf]
    %v1059 = vld [vmem:[%s2 + $0x30] sm:$0xf]
    %v1060 = vld [vmem:[%s2 + $0x34] sm:$0xf]
    %v1061 = vld [vmem:[%s2 + $0x38] sm:$0xf]
    %v1062 = vld [vmem:[%s2 + $0x3c] sm:$0xf]
    %v1063 = vpack.c.bf16 %v991, %v983
    %v1064 = vpack.c.bf16 %v992, %v984
    %v1065 = vpack.c.bf16 %v993, %v985
    %v1066 = vpack.c.bf16 %v994, %v986
    %v1067 = vpack.c.bf16 %v995, %v987
    %v1068 = vpack.c.bf16 %v996, %v988
    %v1069 = vpack.c.bf16 %v997, %v989
    %v1070 = vpack.c.bf16 %v998, %v990
    %v1071 = vpack.c.bf16 %v1007, %v999
    %v1072 = vpack.c.bf16 %v1008, %v1000
    %v1073 = vpack.c.bf16 %v1009, %v1001
    %v1074 = vpack.c.bf16 %v1010, %v1002
    %v1075 = vpack.c.bf16 %v1011, %v1003
    %v1076 = vpack.c.bf16 %v1012, %v1004
    %v1077 = vpack.c.bf16 %v1013, %v1005
    %v1078 = vpack.c.bf16 %v1014, %v1006
    %v1079 = vpack.c.bf16 %v1023, %v1015
    %v1080 = vpack.c.bf16 %v1024, %v1016
    %v1081 = vpack.c.bf16 %v1025, %v1017
    %v1082 = vpack.c.bf16 %v1026, %v1018
    %v1083 = vpack.c.bf16 %v1027, %v1019
    %v1084 = vpack.c.bf16 %v1028, %v1020
    %v1085 = vpack.c.bf16 %v1029, %v1021
    %v1086 = vpack.c.bf16 %v1030, %v1022
    %v1087 = vpack.c.bf16 %v1039, %v1031
    %v1088 = vpack.c.bf16 %v1040, %v1032
    %v1089 = vpack.c.bf16 %v1041, %v1033
    %v1090 = vpack.c.bf16 %v1042, %v1034
    %v1091 = vpack.c.bf16 %v1043, %v1035
    %v1092 = vpack.c.bf16 %v1044, %v1036
    %v1093 = vpack.c.bf16 %v1045, %v1037
    %v1094 = vpack.c.bf16 %v1046, %v1038
    %v1095 = vld [vmem:[%s4 + $0x40] sm:$0xff]
    %v1096 = vld [vmem:[%s4 + $0x48] sm:$0xff]
    %v1097 = vld [vmem:[%s4 + $0x50] sm:$0xff]
    %v1098 = vld [vmem:[%s4 + $0x58] sm:$0xff]
    %v1099 = vld [vmem:[%s4 + $0x60] sm:$0xff]
    %v1100 = vld [vmem:[%s4 + $0x68] sm:$0xff]
    %v1101 = vld [vmem:[%s4 + $0x70] sm:$0xff]
    %v1102 = vld [vmem:[%s4 + $0x78] sm:$0xff]
    %v1103 = vld [vmem:[%s4 + $0x80] sm:$0xff]
    %v1104 = vld [vmem:[%s4 + $0x88] sm:$0xff]
    %v1105 = vld [vmem:[%s4 + $0x90] sm:$0xff]
    %v1106 = vld [vmem:[%s4 + $0x98] sm:$0xff]
    %v1107 = vld [vmem:[%s4 + $0xa0] sm:$0xff]
    %v1108 = vld [vmem:[%s4 + $0xa8] sm:$0xff]
    %v1109 = vld [vmem:[%s4 + $0xb0] sm:$0xff]
    %v1110 = vld [vmem:[%s4 + $0xb8] sm:$0xff]
    %1112 = vset.pattern.permute.xlu0 0
    %1113 = vperm.xlu0 %1112, %v1095
    %v1114 = vpop.permute.xlu0 %1113
    %1117 = vset.pattern.permute.xlu0 0
    %1118 = vperm.xlu0 %1117, %v1096
    %v1119 = vpop.permute.xlu0 %1118
    %1122 = vset.pattern.permute.xlu0 0
    %1123 = vperm.xlu0 %1122, %v1097
    %v1124 = vpop.permute.xlu0 %1123
    %1127 = vset.pattern.permute.xlu0 0
    %1128 = vperm.xlu0 %1127, %v1098
    %v1129 = vpop.permute.xlu0 %1128
    %1132 = vset.pattern.permute.xlu0 0
    %1133 = vperm.xlu0 %1132, %v1099
    %v1134 = vpop.permute.xlu0 %1133
    %1137 = vset.pattern.permute.xlu0 0
    %1138 = vperm.xlu0 %1137, %v1100
    %v1139 = vpop.permute.xlu0 %1138
    %1142 = vset.pattern.permute.xlu0 0
    %1143 = vperm.xlu0 %1142, %v1101
    %v1144 = vpop.permute.xlu0 %1143
    %1147 = vset.pattern.permute.xlu0 0
    %1148 = vperm.xlu0 %1147, %v1102
    %v1149 = vpop.permute.xlu0 %1148
    %1152 = vset.pattern.permute.xlu0 0
    %1153 = vperm.xlu0 %1152, %v1103
    %v1154 = vpop.permute.xlu0 %1153
    %1157 = vset.pattern.permute.xlu0 0
    %1158 = vperm.xlu0 %1157, %v1104
    %v1159 = vpop.permute.xlu0 %1158
    %1162 = vset.pattern.permute.xlu0 0
    %1163 = vperm.xlu0 %1162, %v1105
    %v1164 = vpop.permute.xlu0 %1163
    %1167 = vset.pattern.permute.xlu0 0
    %1168 = vperm.xlu0 %1167, %v1106
    %v1169 = vpop.permute.xlu0 %1168
    %1172 = vset.pattern.permute.xlu0 0
    %1173 = vperm.xlu0 %1172, %v1107
    %v1174 = vpop.permute.xlu0 %1173
    %1177 = vset.pattern.permute.xlu0 0
    %1178 = vperm.xlu0 %1177, %v1108
    %v1179 = vpop.permute.xlu0 %1178
    %1182 = vset.pattern.permute.xlu0 0
    %1183 = vperm.xlu0 %1182, %v1109
    %v1184 = vpop.permute.xlu0 %1183
    %1187 = vset.pattern.permute.xlu0 0
    %1188 = vperm.xlu0 %1187, %v1110
    %v1189 = vpop.permute.xlu0 %1188
    %v1207 = vunpack.c.l.b16 %v1047
    %v1208 = vunpack.c.l.b16 %v1048
    %v1209 = vunpack.c.l.b16 %v1049
    %v1210 = vunpack.c.l.b16 %v1050
    %v1211 = vunpack.c.l.b16 %v1051
    %v1212 = vunpack.c.l.b16 %v1052
    %v1213 = vunpack.c.l.b16 %v1053
    %v1214 = vunpack.c.l.b16 %v1054
    %v1215 = vunpack.c.l.b16 %v1055
    %v1216 = vunpack.c.l.b16 %v1056
    %v1217 = vunpack.c.l.b16 %v1057
    %v1218 = vunpack.c.l.b16 %v1058
    %v1219 = vunpack.c.l.b16 %v1059
    %v1220 = vunpack.c.l.b16 %v1060
    %v1221 = vunpack.c.l.b16 %v1061
    %v1222 = vunpack.c.l.b16 %v1062
    %v1223 = vpack.c.b16 %v1208, %v1207
    %v1224 = vpack.c.b16 %v1210, %v1209
    %v1225 = vpack.c.b16 %v1212, %v1211
    %v1226 = vpack.c.b16 %v1214, %v1213
    %v1227 = vpack.c.b16 %v1216, %v1215
    %v1228 = vpack.c.b16 %v1218, %v1217
    %v1229 = vpack.c.b16 %v1220, %v1219
    %v1230 = vpack.c.b16 %v1222, %v1221
    %vm1231 = vcmask 523264
    %v1233 = vsel %vm1231, %v1223, 0
    %v1236 = vsel %vm1231, %v1224, 0
    %v1239 = vsel %vm1231, %v1225, 0
    %v1242 = vsel %vm1231, %v1226, 0
    %v1245 = vsel %vm1231, %v1227, 0
    %v1248 = vsel %vm1231, %v1228, 0
    %v1251 = vsel %vm1231, %v1229, 0
    %v1254 = vsel %vm1231, %v1230, 0
    %1256 = vmatpush.bf16.msra.mxu0 0
    %1257 = vmatpush.bf16.msra.mxu0 0
    %1258 = vmatpush.bf16.msra.mxu0 0
    %1259 = vmatpush.bf16.msra.mxu0 0
    %1260 = vmatpush.bf16.msra.mxu0 %v1087
    %1261 = vmatpush.bf16.msra.mxu0 %v1079
    %1262 = vmatpush.bf16.msra.mxu0 %v1071
    %1263 = vmatpush.bf16.msra.mxu0 %v1063
    %1264 = vmatmul.bf16.gmra.mxu0 %v1233
    %v1265 = vpop.f32.mrf.mxu0
    %v1266 = vadd.f32 %v1114, %v1265
    %v1267 = vpop.f32.mrf.mxu0
    %v1268 = vadd.f32 %v1119, %v1267
    %1269 = vmatmul.bf16.gmra.mxu0 %v1236
    %v1270 = vpop.f32.mrf.mxu0
    %v1271 = vadd.f32 %v1124, %v1270
    %v1272 = vpop.f32.mrf.mxu0
    %v1273 = vadd.f32 %v1129, %v1272
    %1274 = vmatmul.bf16.gmra.mxu0 %v1239
    %v1275 = vpop.f32.mrf.mxu0
    %v1276 = vadd.f32 %v1134, %v1275
    %v1277 = vpop.f32.mrf.mxu0
    %v1278 = vadd.f32 %v1139, %v1277
    %1279 = vmatmul.bf16.gmra.mxu0 %v1242
    %v1280 = vpop.f32.mrf.mxu0
    %v1281 = vadd.f32 %v1144, %v1280
    %v1282 = vpop.f32.mrf.mxu0
    %v1283 = vadd.f32 %v1149, %v1282
    %1284 = vmatmul.bf16.gmra.mxu0 %v1245
    %v1285 = vpop.f32.mrf.mxu0
    %v1286 = vadd.f32 %v1154, %v1285
    %v1287 = vpop.f32.mrf.mxu0
    %v1288 = vadd.f32 %v1159, %v1287
    %1289 = vmatmul.bf16.gmra.mxu0 %v1248
    %v1290 = vpop.f32.mrf.mxu0
    %v1291 = vadd.f32 %v1164, %v1290
    %v1292 = vpop.f32.mrf.mxu0
    %v1293 = vadd.f32 %v1169, %v1292
    %1294 = vmatmul.bf16.gmra.mxu0 %v1251
    %v1295 = vpop.f32.mrf.mxu0
    %v1296 = vadd.f32 %v1174, %v1295
    %v1297 = vpop.f32.mrf.mxu0
    %v1298 = vadd.f32 %v1179, %v1297
    %1299 = vmatmul.bf16.gmra.mxu0 %v1254
    %v1300 = vpop.f32.mrf.mxu0
    %v1301 = vadd.f32 %v1184, %v1300
    %v1302 = vpop.f32.mrf.mxu0
    %v1303 = vadd.f32 %v1189, %v1302
    %1304 = vdwg.mxu0
    %1305 = vmatpush.bf16.msra.mxu0 0
    %1306 = vmatpush.bf16.msra.mxu0 0
    %1307 = vmatpush.bf16.msra.mxu0 0
    %1308 = vmatpush.bf16.msra.mxu0 0
    %1309 = vmatpush.bf16.msra.mxu0 %v1088
    %1310 = vmatpush.bf16.msra.mxu0 %v1080
    %1311 = vmatpush.bf16.msra.mxu0 %v1072
    %1312 = vmatpush.bf16.msra.mxu0 %v1064
    %1313 = vmatmul.bf16.gmra.mxu0 %v1233
    %v1314 = vpop.f32.mrf.mxu0
    %v1315 = vadd.f32 %v1114, %v1314
    %v1316 = vpop.f32.mrf.mxu0
    %v1317 = vadd.f32 %v1119, %v1316
    %1318 = vmatmul.bf16.gmra.mxu0 %v1236
    %v1319 = vpop.f32.mrf.mxu0
    %v1320 = vadd.f32 %v1124, %v1319
    %v1321 = vpop.f32.mrf.mxu0
    %v1322 = vadd.f32 %v1129, %v1321
    %1323 = vmatmul.bf16.gmra.mxu0 %v1239
    %v1324 = vpop.f32.mrf.mxu0
    %v1325 = vadd.f32 %v1134, %v1324
    %v1326 = vpop.f32.mrf.mxu0
    %v1327 = vadd.f32 %v1139, %v1326
    %1328 = vmatmul.bf16.gmra.mxu0 %v1242
    %v1329 = vpop.f32.mrf.mxu0
    %v1330 = vadd.f32 %v1144, %v1329
    %v1331 = vpop.f32.mrf.mxu0
    %v1332 = vadd.f32 %v1149, %v1331
    %1333 = vmatmul.bf16.gmra.mxu0 %v1245
    %v1334 = vpop.f32.mrf.mxu0
    %v1335 = vadd.f32 %v1154, %v1334
    %v1336 = vpop.f32.mrf.mxu0
    %v1337 = vadd.f32 %v1159, %v1336
    %1338 = vmatmul.bf16.gmra.mxu0 %v1248
    %v1339 = vpop.f32.mrf.mxu0
    %v1340 = vadd.f32 %v1164, %v1339
    %v1341 = vpop.f32.mrf.mxu0
    %v1342 = vadd.f32 %v1169, %v1341
    %1343 = vmatmul.bf16.gmra.mxu0 %v1251
    %v1344 = vpop.f32.mrf.mxu0
    %v1345 = vadd.f32 %v1174, %v1344
    %v1346 = vpop.f32.mrf.mxu0
    %v1347 = vadd.f32 %v1179, %v1346
    %1348 = vmatmul.bf16.gmra.mxu0 %v1254
    %v1349 = vpop.f32.mrf.mxu0
    %v1350 = vadd.f32 %v1184, %v1349
    %v1351 = vpop.f32.mrf.mxu0
    %v1352 = vadd.f32 %v1189, %v1351
    %1353 = vdwg.mxu0
    %1354 = vmatpush.bf16.msra.mxu0 0
    %1355 = vmatpush.bf16.msra.mxu0 0
    %1356 = vmatpush.bf16.msra.mxu0 0
    %1357 = vmatpush.bf16.msra.mxu0 0
    %1358 = vmatpush.bf16.msra.mxu0 %v1089
    %1359 = vmatpush.bf16.msra.mxu0 %v1081
    %1360 = vmatpush.bf16.msra.mxu0 %v1073
    %1361 = vmatpush.bf16.msra.mxu0 %v1065
    %1362 = vmatmul.bf16.gmra.mxu0 %v1233
    %v1363 = vpop.f32.mrf.mxu0
    %v1364 = vadd.f32 %v1114, %v1363
    %v1365 = vpop.f32.mrf.mxu0
    %v1366 = vadd.f32 %v1119, %v1365
    %1367 = vmatmul.bf16.gmra.mxu0 %v1236
    %v1368 = vpop.f32.mrf.mxu0
    %v1369 = vadd.f32 %v1124, %v1368
    %v1370 = vpop.f32.mrf.mxu0
    %v1371 = vadd.f32 %v1129, %v1370
    %1372 = vmatmul.bf16.gmra.mxu0 %v1239
    %v1373 = vpop.f32.mrf.mxu0
    %v1374 = vadd.f32 %v1134, %v1373
    %v1375 = vpop.f32.mrf.mxu0
    %v1376 = vadd.f32 %v1139, %v1375
    %1377 = vmatmul.bf16.gmra.mxu0 %v1242
    %v1378 = vpop.f32.mrf.mxu0
    %v1379 = vadd.f32 %v1144, %v1378
    %v1380 = vpop.f32.mrf.mxu0
    %v1381 = vadd.f32 %v1149, %v1380
    %1382 = vmatmul.bf16.gmra.mxu0 %v1245
    %v1383 = vpop.f32.mrf.mxu0
    %v1384 = vadd.f32 %v1154, %v1383
    %v1385 = vpop.f32.mrf.mxu0
    %v1386 = vadd.f32 %v1159, %v1385
    %1387 = vmatmul.bf16.gmra.mxu0 %v1248
    %v1388 = vpop.f32.mrf.mxu0
    %v1389 = vadd.f32 %v1164, %v1388
    %v1390 = vpop.f32.mrf.mxu0
    %v1391 = vadd.f32 %v1169, %v1390
    %1392 = vmatmul.bf16.gmra.mxu0 %v1251
    %v1393 = vpop.f32.mrf.mxu0
    %v1394 = vadd.f32 %v1174, %v1393
    %v1395 = vpop.f32.mrf.mxu0
    %v1396 = vadd.f32 %v1179, %v1395
    %1397 = vmatmul.bf16.gmra.mxu0 %v1254
    %v1398 = vpop.f32.mrf.mxu0
    %v1399 = vadd.f32 %v1184, %v1398
    %v1400 = vpop.f32.mrf.mxu0
    %v1401 = vadd.f32 %v1189, %v1400
    %1402 = vdwg.mxu0
    %1403 = vmatpush.bf16.msra.mxu0 0
    %1404 = vmatpush.bf16.msra.mxu0 0
    %1405 = vmatpush.bf16.msra.mxu0 0
    %1406 = vmatpush.bf16.msra.mxu0 0
    %1407 = vmatpush.bf16.msra.mxu0 %v1090
    %1408 = vmatpush.bf16.msra.mxu0 %v1082
    %1409 = vmatpush.bf16.msra.mxu0 %v1074
    %1410 = vmatpush.bf16.msra.mxu0 %v1066
    %1411 = vmatmul.bf16.gmra.mxu0 %v1233
    %v1412 = vpop.f32.mrf.mxu0
    %v1413 = vadd.f32 %v1114, %v1412
    %v1414 = vpop.f32.mrf.mxu0
    %v1415 = vadd.f32 %v1119, %v1414
    %1416 = vmatmul.bf16.gmra.mxu0 %v1236
    %v1417 = vpop.f32.mrf.mxu0
    %v1418 = vadd.f32 %v1124, %v1417
    %v1419 = vpop.f32.mrf.mxu0
    %v1420 = vadd.f32 %v1129, %v1419
    %1421 = vmatmul.bf16.gmra.mxu0 %v1239
    %v1422 = vpop.f32.mrf.mxu0
    %v1423 = vadd.f32 %v1134, %v1422
    %v1424 = vpop.f32.mrf.mxu0
    %v1425 = vadd.f32 %v1139, %v1424
    %1426 = vmatmul.bf16.gmra.mxu0 %v1242
    %v1427 = vpop.f32.mrf.mxu0
    %v1428 = vadd.f32 %v1144, %v1427
    %v1429 = vpop.f32.mrf.mxu0
    %v1430 = vadd.f32 %v1149, %v1429
    %1431 = vmatmul.bf16.gmra.mxu0 %v1245
    %v1432 = vpop.f32.mrf.mxu0
    %v1433 = vadd.f32 %v1154, %v1432
    %v1434 = vpop.f32.mrf.mxu0
    %v1435 = vadd.f32 %v1159, %v1434
    %1436 = vmatmul.bf16.gmra.mxu0 %v1248
    %v1437 = vpop.f32.mrf.mxu0
    %v1438 = vadd.f32 %v1164, %v1437
    %v1439 = vpop.f32.mrf.mxu0
    %v1440 = vadd.f32 %v1169, %v1439
    %1441 = vmatmul.bf16.gmra.mxu0 %v1251
    %v1442 = vpop.f32.mrf.mxu0
    %v1443 = vadd.f32 %v1174, %v1442
    %v1444 = vpop.f32.mrf.mxu0
    %v1445 = vadd.f32 %v1179, %v1444
    %1446 = vmatmul.bf16.gmra.mxu0 %v1254
    %v1447 = vpop.f32.mrf.mxu0
    %v1448 = vadd.f32 %v1184, %v1447
    %v1449 = vpop.f32.mrf.mxu0
    %v1450 = vadd.f32 %v1189, %v1449
    %1451 = vdwg.mxu0
    %1452 = vmatpush.bf16.msra.mxu0 0
    %1453 = vmatpush.bf16.msra.mxu0 0
    %1454 = vmatpush.bf16.msra.mxu0 0
    %1455 = vmatpush.bf16.msra.mxu0 0
    %1456 = vmatpush.bf16.msra.mxu0 %v1091
    %1457 = vmatpush.bf16.msra.mxu0 %v1083
    %1458 = vmatpush.bf16.msra.mxu0 %v1075
    %1459 = vmatpush.bf16.msra.mxu0 %v1067
    %1460 = vmatmul.bf16.gmra.mxu0 %v1233
    %v1461 = vpop.f32.mrf.mxu0
    %v1462 = vadd.f32 %v1114, %v1461
    %v1463 = vpop.f32.mrf.mxu0
    %v1464 = vadd.f32 %v1119, %v1463
    %1465 = vmatmul.bf16.gmra.mxu0 %v1236
    %v1466 = vpop.f32.mrf.mxu0
    %v1467 = vadd.f32 %v1124, %v1466
    %v1468 = vpop.f32.mrf.mxu0
    %v1469 = vadd.f32 %v1129, %v1468
    %1470 = vmatmul.bf16.gmra.mxu0 %v1239
    %v1471 = vpop.f32.mrf.mxu0
    %v1472 = vadd.f32 %v1134, %v1471
    %v1473 = vpop.f32.mrf.mxu0
    %v1474 = vadd.f32 %v1139, %v1473
    %1475 = vmatmul.bf16.gmra.mxu0 %v1242
    %v1476 = vpop.f32.mrf.mxu0
    %v1477 = vadd.f32 %v1144, %v1476
    %v1478 = vpop.f32.mrf.mxu0
    %v1479 = vadd.f32 %v1149, %v1478
    %1480 = vmatmul.bf16.gmra.mxu0 %v1245
    %v1481 = vpop.f32.mrf.mxu0
    %v1482 = vadd.f32 %v1154, %v1481
    %v1483 = vpop.f32.mrf.mxu0
    %v1484 = vadd.f32 %v1159, %v1483
    %1485 = vmatmul.bf16.gmra.mxu0 %v1248
    %v1486 = vpop.f32.mrf.mxu0
    %v1487 = vadd.f32 %v1164, %v1486
    %v1488 = vpop.f32.mrf.mxu0
    %v1489 = vadd.f32 %v1169, %v1488
    %1490 = vmatmul.bf16.gmra.mxu0 %v1251
    %v1491 = vpop.f32.mrf.mxu0
    %v1492 = vadd.f32 %v1174, %v1491
    %v1493 = vpop.f32.mrf.mxu0
    %v1494 = vadd.f32 %v1179, %v1493
    %1495 = vmatmul.bf16.gmra.mxu0 %v1254
    %v1496 = vpop.f32.mrf.mxu0
    %v1497 = vadd.f32 %v1184, %v1496
    %v1498 = vpop.f32.mrf.mxu0
    %v1499 = vadd.f32 %v1189, %v1498
    %1500 = vdwg.mxu0
    %1501 = vmatpush.bf16.msra.mxu0 0
    %1502 = vmatpush.bf16.msra.mxu0 0
    %1503 = vmatpush.bf16.msra.mxu0 0
    %1504 = vmatpush.bf16.msra.mxu0 0
    %1505 = vmatpush.bf16.msra.mxu0 %v1092
    %1506 = vmatpush.bf16.msra.mxu0 %v1084
    %1507 = vmatpush.bf16.msra.mxu0 %v1076
    %1508 = vmatpush.bf16.msra.mxu0 %v1068
    %1509 = vmatmul.bf16.gmra.mxu0 %v1233
    %v1510 = vpop.f32.mrf.mxu0
    %v1511 = vadd.f32 %v1114, %v1510
    %v1512 = vpop.f32.mrf.mxu0
    %v1513 = vadd.f32 %v1119, %v1512
    %1514 = vmatmul.bf16.gmra.mxu0 %v1236
    %v1515 = vpop.f32.mrf.mxu0
    %v1516 = vadd.f32 %v1124, %v1515
    %v1517 = vpop.f32.mrf.mxu0
    %v1518 = vadd.f32 %v1129, %v1517
    %1519 = vmatmul.bf16.gmra.mxu0 %v1239
    %v1520 = vpop.f32.mrf.mxu0
    %v1521 = vadd.f32 %v1134, %v1520
    %v1522 = vpop.f32.mrf.mxu0
    %v1523 = vadd.f32 %v1139, %v1522
    %1524 = vmatmul.bf16.gmra.mxu0 %v1242
    %v1525 = vpop.f32.mrf.mxu0
    %v1526 = vadd.f32 %v1144, %v1525
    %v1527 = vpop.f32.mrf.mxu0
    %v1528 = vadd.f32 %v1149, %v1527
    %1529 = vmatmul.bf16.gmra.mxu0 %v1245
    %v1530 = vpop.f32.mrf.mxu0
    %v1531 = vadd.f32 %v1154, %v1530
    %v1532 = vpop.f32.mrf.mxu0
    %v1533 = vadd.f32 %v1159, %v1532
    %1534 = vmatmul.bf16.gmra.mxu0 %v1248
    %v1535 = vpop.f32.mrf.mxu0
    %v1536 = vadd.f32 %v1164, %v1535
    %v1537 = vpop.f32.mrf.mxu0
    %v1538 = vadd.f32 %v1169, %v1537
    %1539 = vmatmul.bf16.gmra.mxu0 %v1251
    %v1540 = vpop.f32.mrf.mxu0
    %v1541 = vadd.f32 %v1174, %v1540
    %v1542 = vpop.f32.mrf.mxu0
    %v1543 = vadd.f32 %v1179, %v1542
    %1544 = vmatmul.bf16.gmra.mxu0 %v1254
    %v1545 = vpop.f32.mrf.mxu0
    %v1546 = vadd.f32 %v1184, %v1545
    %v1547 = vpop.f32.mrf.mxu0
    %v1548 = vadd.f32 %v1189, %v1547
    %1549 = vdwg.mxu0
    %1550 = vmatpush.bf16.msra.mxu0 0
    %1551 = vmatpush.bf16.msra.mxu0 0
    %1552 = vmatpush.bf16.msra.mxu0 0
    %1553 = vmatpush.bf16.msra.mxu0 0
    %1554 = vmatpush.bf16.msra.mxu0 %v1093
    %1555 = vmatpush.bf16.msra.mxu0 %v1085
    %1556 = vmatpush.bf16.msra.mxu0 %v1077
    %1557 = vmatpush.bf16.msra.mxu0 %v1069
    %1558 = vmatmul.bf16.gmra.mxu0 %v1233
    %v1559 = vpop.f32.mrf.mxu0
    %v1560 = vadd.f32 %v1114, %v1559
    %v1561 = vpop.f32.mrf.mxu0
    %v1562 = vadd.f32 %v1119, %v1561
    %1563 = vmatmul.bf16.gmra.mxu0 %v1236
    %v1564 = vpop.f32.mrf.mxu0
    %v1565 = vadd.f32 %v1124, %v1564
    %v1566 = vpop.f32.mrf.mxu0
    %v1567 = vadd.f32 %v1129, %v1566
    %1568 = vmatmul.bf16.gmra.mxu0 %v1239
    %v1569 = vpop.f32.mrf.mxu0
    %v1570 = vadd.f32 %v1134, %v1569
    %v1571 = vpop.f32.mrf.mxu0
    %v1572 = vadd.f32 %v1139, %v1571
    %1573 = vmatmul.bf16.gmra.mxu0 %v1242
    %v1574 = vpop.f32.mrf.mxu0
    %v1575 = vadd.f32 %v1144, %v1574
    %v1576 = vpop.f32.mrf.mxu0
    %v1577 = vadd.f32 %v1149, %v1576
    %1578 = vmatmul.bf16.gmra.mxu0 %v1245
    %v1579 = vpop.f32.mrf.mxu0
    %v1580 = vadd.f32 %v1154, %v1579
    %v1581 = vpop.f32.mrf.mxu0
    %v1582 = vadd.f32 %v1159, %v1581
    %1583 = vmatmul.bf16.gmra.mxu0 %v1248
    %v1584 = vpop.f32.mrf.mxu0
    %v1585 = vadd.f32 %v1164, %v1584
    %v1586 = vpop.f32.mrf.mxu0
    %v1587 = vadd.f32 %v1169, %v1586
    %1588 = vmatmul.bf16.gmra.mxu0 %v1251
    %v1589 = vpop.f32.mrf.mxu0
    %v1590 = vadd.f32 %v1174, %v1589
    %v1591 = vpop.f32.mrf.mxu0
    %v1592 = vadd.f32 %v1179, %v1591
    %1593 = vmatmul.bf16.gmra.mxu0 %v1254
    %v1594 = vpop.f32.mrf.mxu0
    %v1595 = vadd.f32 %v1184, %v1594
    %v1596 = vpop.f32.mrf.mxu0
    %v1597 = vadd.f32 %v1189, %v1596
    %1598 = vdwg.mxu0
    %1599 = vmatpush.bf16.msra.mxu0 0
    %1600 = vmatpush.bf16.msra.mxu0 0
    %1601 = vmatpush.bf16.msra.mxu0 0
    %1602 = vmatpush.bf16.msra.mxu0 0
    %1603 = vmatpush.bf16.msra.mxu0 %v1094
    %1604 = vmatpush.bf16.msra.mxu0 %v1086
    %1605 = vmatpush.bf16.msra.mxu0 %v1078
    %1606 = vmatpush.bf16.msra.mxu0 %v1070
    %1607 = vmatmul.bf16.gmra.mxu0 %v1233
    %v1608 = vpop.f32.mrf.mxu0
    %v1609 = vadd.f32 %v1114, %v1608
    %v1610 = vpop.f32.mrf.mxu0
    %v1611 = vadd.f32 %v1119, %v1610
    %1612 = vmatmul.bf16.gmra.mxu0 %v1236
    %v1613 = vpop.f32.mrf.mxu0
    %v1614 = vadd.f32 %v1124, %v1613
    %v1615 = vpop.f32.mrf.mxu0
    %v1616 = vadd.f32 %v1129, %v1615
    %1617 = vmatmul.bf16.gmra.mxu0 %v1239
    %v1618 = vpop.f32.mrf.mxu0
    %v1619 = vadd.f32 %v1134, %v1618
    %v1620 = vpop.f32.mrf.mxu0
    %v1621 = vadd.f32 %v1139, %v1620
    %1622 = vmatmul.bf16.gmra.mxu0 %v1242
    %v1623 = vpop.f32.mrf.mxu0
    %v1624 = vadd.f32 %v1144, %v1623
    %v1625 = vpop.f32.mrf.mxu0
    %v1626 = vadd.f32 %v1149, %v1625
    %1627 = vmatmul.bf16.gmra.mxu0 %v1245
    %v1628 = vpop.f32.mrf.mxu0
    %v1629 = vadd.f32 %v1154, %v1628
    %v1630 = vpop.f32.mrf.mxu0
    %v1631 = vadd.f32 %v1159, %v1630
    %1632 = vmatmul.bf16.gmra.mxu0 %v1248
    %v1633 = vpop.f32.mrf.mxu0
    %v1634 = vadd.f32 %v1164, %v1633
    %v1635 = vpop.f32.mrf.mxu0
    %v1636 = vadd.f32 %v1169, %v1635
    %1637 = vmatmul.bf16.gmra.mxu0 %v1251
    %v1638 = vpop.f32.mrf.mxu0
    %v1639 = vadd.f32 %v1174, %v1638
    %v1640 = vpop.f32.mrf.mxu0
    %v1641 = vadd.f32 %v1179, %v1640
    %1642 = vmatmul.bf16.gmra.mxu0 %v1254
    %v1643 = vpop.f32.mrf.mxu0
    %v1644 = vadd.f32 %v1184, %v1643
    %v1645 = vpop.f32.mrf.mxu0
    %v1646 = vadd.f32 %v1189, %v1645
    %1647 = vdwg.mxu0
    %v1648 = vmax.f32 %v1266, 0.0
    %v1649 = vmax.f32 %v1315, 0.0
    %v1650 = vmax.f32 %v1364, 0.0
    %v1651 = vmax.f32 %v1413, 0.0
    %v1652 = vmax.f32 %v1462, 0.0
    %v1653 = vmax.f32 %v1511, 0.0
    %v1654 = vmax.f32 %v1560, 0.0
    %v1655 = vmax.f32 %v1609, 0.0
    %v1656 = vmax.f32 %v1268, 0.0
    %v1657 = vmax.f32 %v1317, 0.0
    %v1658 = vmax.f32 %v1366, 0.0
    %v1659 = vmax.f32 %v1415, 0.0
    %v1660 = vmax.f32 %v1464, 0.0
    %v1661 = vmax.f32 %v1513, 0.0
    %v1662 = vmax.f32 %v1562, 0.0
    %v1663 = vmax.f32 %v1611, 0.0
    %v1664 = vmax.f32 %v1271, 0.0
    %v1665 = vmax.f32 %v1320, 0.0
    %v1666 = vmax.f32 %v1369, 0.0
    %v1667 = vmax.f32 %v1418, 0.0
    %v1668 = vmax.f32 %v1467, 0.0
    %v1669 = vmax.f32 %v1516, 0.0
    %v1670 = vmax.f32 %v1565, 0.0
    %v1671 = vmax.f32 %v1614, 0.0
    %v1672 = vmax.f32 %v1273, 0.0
    %v1673 = vmax.f32 %v1322, 0.0
    %v1674 = vmax.f32 %v1371, 0.0
    %v1675 = vmax.f32 %v1420, 0.0
    %v1676 = vmax.f32 %v1469, 0.0
    %v1677 = vmax.f32 %v1518, 0.0
    %v1678 = vmax.f32 %v1567, 0.0
    %v1679 = vmax.f32 %v1616, 0.0
    %v1680 = vmax.f32 %v1276, 0.0
    %v1681 = vmax.f32 %v1325, 0.0
    %v1682 = vmax.f32 %v1374, 0.0
    %v1683 = vmax.f32 %v1423, 0.0
    %v1684 = vmax.f32 %v1472, 0.0
    %v1685 = vmax.f32 %v1521, 0.0
    %v1686 = vmax.f32 %v1570, 0.0
    %v1687 = vmax.f32 %v1619, 0.0
    %v1688 = vmax.f32 %v1278, 0.0
    %v1689 = vmax.f32 %v1327, 0.0
    %v1690 = vmax.f32 %v1376, 0.0
    %v1691 = vmax.f32 %v1425, 0.0
    %v1692 = vmax.f32 %v1474, 0.0
    %v1693 = vmax.f32 %v1523, 0.0
    %v1694 = vmax.f32 %v1572, 0.0
    %v1695 = vmax.f32 %v1621, 0.0
    %v1696 = vmax.f32 %v1281, 0.0
    %v1697 = vmax.f32 %v1330, 0.0
    %v1698 = vmax.f32 %v1379, 0.0
    %v1699 = vmax.f32 %v1428, 0.0
    %v1700 = vmax.f32 %v1477, 0.0
    %v1701 = vmax.f32 %v1526, 0.0
    %v1702 = vmax.f32 %v1575, 0.0
    %v1703 = vmax.f32 %v1624, 0.0
    %v1704 = vmax.f32 %v1283, 0.0
    %v1705 = vmax.f32 %v1332, 0.0
    %v1706 = vmax.f32 %v1381, 0.0
    %v1707 = vmax.f32 %v1430, 0.0
    %v1708 = vmax.f32 %v1479, 0.0
    %v1709 = vmax.f32 %v1528, 0.0
    %v1710 = vmax.f32 %v1577, 0.0
    %v1711 = vmax.f32 %v1626, 0.0
    %v1712 = vmax.f32 %v1286, 0.0
    %v1713 = vmax.f32 %v1335, 0.0
    %v1714 = vmax.f32 %v1384, 0.0
    %v1715 = vmax.f32 %v1433, 0.0
    %v1716 = vmax.f32 %v1482, 0.0
    %v1717 = vmax.f32 %v1531, 0.0
    %v1718 = vmax.f32 %v1580, 0.0
    %v1719 = vmax.f32 %v1629, 0.0
    %v1720 = vmax.f32 %v1288, 0.0
    %v1721 = vmax.f32 %v1337, 0.0
    %v1722 = vmax.f32 %v1386, 0.0
    %v1723 = vmax.f32 %v1435, 0.0
    %v1724 = vmax.f32 %v1484, 0.0
    %v1725 = vmax.f32 %v1533, 0.0
    %v1726 = vmax.f32 %v1582, 0.0
    %v1727 = vmax.f32 %v1631, 0.0
    %v1728 = vmax.f32 %v1291, 0.0
    %v1729 = vmax.f32 %v1340, 0.0
    %v1730 = vmax.f32 %v1389, 0.0
    %v1731 = vmax.f32 %v1438, 0.0
    %v1732 = vmax.f32 %v1487, 0.0
    %v1733 = vmax.f32 %v1536, 0.0
    %v1734 = vmax.f32 %v1585, 0.0
    %v1735 = vmax.f32 %v1634, 0.0
    %v1736 = vmax.f32 %v1293, 0.0
    %v1737 = vmax.f32 %v1342, 0.0
    %v1738 = vmax.f32 %v1391, 0.0
    %v1739 = vmax.f32 %v1440, 0.0
    %v1740 = vmax.f32 %v1489, 0.0
    %v1741 = vmax.f32 %v1538, 0.0
    %v1742 = vmax.f32 %v1587, 0.0
    %v1743 = vmax.f32 %v1636, 0.0
    %v1744 = vmax.f32 %v1296, 0.0
    %v1745 = vmax.f32 %v1345, 0.0
    %v1746 = vmax.f32 %v1394, 0.0
    %v1747 = vmax.f32 %v1443, 0.0
    %v1748 = vmax.f32 %v1492, 0.0
    %v1749 = vmax.f32 %v1541, 0.0
    %v1750 = vmax.f32 %v1590, 0.0
    %v1751 = vmax.f32 %v1639, 0.0
    %v1752 = vmax.f32 %v1298, 0.0
    %v1753 = vmax.f32 %v1347, 0.0
    %v1754 = vmax.f32 %v1396, 0.0
    %v1755 = vmax.f32 %v1445, 0.0
    %v1756 = vmax.f32 %v1494, 0.0
    %v1757 = vmax.f32 %v1543, 0.0
    %v1758 = vmax.f32 %v1592, 0.0
    %v1759 = vmax.f32 %v1641, 0.0
    %v1760 = vmax.f32 %v1301, 0.0
    %v1761 = vmax.f32 %v1350, 0.0
    %v1762 = vmax.f32 %v1399, 0.0
    %v1763 = vmax.f32 %v1448, 0.0
    %v1764 = vmax.f32 %v1497, 0.0
    %v1765 = vmax.f32 %v1546, 0.0
    %v1766 = vmax.f32 %v1595, 0.0
    %v1767 = vmax.f32 %v1644, 0.0
    %v1768 = vmax.f32 %v1303, 0.0
    %v1769 = vmax.f32 %v1352, 0.0
    %v1770 = vmax.f32 %v1401, 0.0
    %v1771 = vmax.f32 %v1450, 0.0
    %v1772 = vmax.f32 %v1499, 0.0
    %v1773 = vmax.f32 %v1548, 0.0
    %v1774 = vmax.f32 %v1597, 0.0
    %v1775 = vmax.f32 %v1646, 0.0
    %v1776 = vld [vmem:[%s3] sm:$0xf]
    %v1777 = vld [vmem:[%s3 + $0x4] sm:$0xf]
    %v1778 = vpack.c.bf16 %v1656, %v1648
    %v1779 = vpack.c.bf16 %v1657, %v1649
    %v1780 = vpack.c.bf16 %v1658, %v1650
    %v1781 = vpack.c.bf16 %v1659, %v1651
    %v1782 = vpack.c.bf16 %v1660, %v1652
    %v1783 = vpack.c.bf16 %v1661, %v1653
    %v1784 = vpack.c.bf16 %v1662, %v1654
    %v1785 = vpack.c.bf16 %v1663, %v1655
    %v1786 = vpack.c.bf16 %v1672, %v1664
    %v1787 = vpack.c.bf16 %v1673, %v1665
    %v1788 = vpack.c.bf16 %v1674, %v1666
    %v1789 = vpack.c.bf16 %v1675, %v1667
    %v1790 = vpack.c.bf16 %v1676, %v1668
    %v1791 = vpack.c.bf16 %v1677, %v1669
    %v1792 = vpack.c.bf16 %v1678, %v1670
    %v1793 = vpack.c.bf16 %v1679, %v1671
    %v1794 = vpack.c.bf16 %v1688, %v1680
    %v1795 = vpack.c.bf16 %v1689, %v1681
    %v1796 = vpack.c.bf16 %v1690, %v1682
    %v1797 = vpack.c.bf16 %v1691, %v1683
    %v1798 = vpack.c.bf16 %v1692, %v1684
    %v1799 = vpack.c.bf16 %v1693, %v1685
    %v1800 = vpack.c.bf16 %v1694, %v1686
    %v1801 = vpack.c.bf16 %v1695, %v1687
    %v1802 = vpack.c.bf16 %v1704, %v1696
    %v1803 = vpack.c.bf16 %v1705, %v1697
    %v1804 = vpack.c.bf16 %v1706, %v1698
    %v1805 = vpack.c.bf16 %v1707, %v1699
    %v1806 = vpack.c.bf16 %v1708, %v1700
    %v1807 = vpack.c.bf16 %v1709, %v1701
    %v1808 = vpack.c.bf16 %v1710, %v1702
    %v1809 = vpack.c.bf16 %v1711, %v1703
    %v1810 = vpack.c.bf16 %v1720, %v1712
    %v1811 = vpack.c.bf16 %v1721, %v1713
    %v1812 = vpack.c.bf16 %v1722, %v1714
    %v1813 = vpack.c.bf16 %v1723, %v1715
    %v1814 = vpack.c.bf16 %v1724, %v1716
    %v1815 = vpack.c.bf16 %v1725, %v1717
    %v1816 = vpack.c.bf16 %v1726, %v1718
    %v1817 = vpack.c.bf16 %v1727, %v1719
    %v1818 = vpack.c.bf16 %v1736, %v1728
    %v1819 = vpack.c.bf16 %v1737, %v1729
    %v1820 = vpack.c.bf16 %v1738, %v1730
    %v1821 = vpack.c.bf16 %v1739, %v1731
    %v1822 = vpack.c.bf16 %v1740, %v1732
    %v1823 = vpack.c.bf16 %v1741, %v1733
    %v1824 = vpack.c.bf16 %v1742, %v1734
    %v1825 = vpack.c.bf16 %v1743, %v1735
    %v1826 = vpack.c.bf16 %v1752, %v1744
    %v1827 = vpack.c.bf16 %v1753, %v1745
    %v1828 = vpack.c.bf16 %v1754, %v1746
    %v1829 = vpack.c.bf16 %v1755, %v1747
    %v1830 = vpack.c.bf16 %v1756, %v1748
    %v1831 = vpack.c.bf16 %v1757, %v1749
    %v1832 = vpack.c.bf16 %v1758, %v1750
    %v1833 = vpack.c.bf16 %v1759, %v1751
    %v1834 = vpack.c.bf16 %v1768, %v1760
    %v1835 = vpack.c.bf16 %v1769, %v1761
    %v1836 = vpack.c.bf16 %v1770, %v1762
    %v1837 = vpack.c.bf16 %v1771, %v1763
    %v1838 = vpack.c.bf16 %v1772, %v1764
    %v1839 = vpack.c.bf16 %v1773, %v1765
    %v1840 = vpack.c.bf16 %v1774, %v1766
    %v1841 = vpack.c.bf16 %v1775, %v1767
    %v1842 = vld [vmem:[%s4 + $0xc0] sm:$0xff]
    %v1843 = vld [vmem:[%s4 + $0xc8] sm:$0xff]
    %1845 = vset.pattern.permute.xlu0 0
    %1846 = vperm.xlu0 %1845, %v1842
    %v1847 = vpop.permute.xlu0 %1846
    %1850 = vset.pattern.permute.xlu0 0
    %1851 = vperm.xlu0 %1850, %v1843
    %v1852 = vpop.permute.xlu0 %1851
    %v1856 = vunpack.c.l.b16 %v1776
    %v1857 = vunpack.c.l.b16 %v1777
    %v1858 = vpack.c.b16 %v1857, %v1856
    %1860 = vmatpush.bf16.msra.mxu0 %v1834
    %1861 = vmatpush.bf16.msra.mxu0 %v1826
    %1862 = vmatpush.bf16.msra.mxu0 %v1818
    %1863 = vmatpush.bf16.msra.mxu0 %v1810
    %1864 = vmatpush.bf16.msra.mxu0 %v1802
    %1865 = vmatpush.bf16.msra.mxu0 %v1794
    %1866 = vmatpush.bf16.msra.mxu0 %v1786
    %1867 = vmatpush.bf16.msra.mxu0 %v1778
    %1868 = vmatmul.bf16.gmra.mxu0 %v1858
    %v1869 = vpop.f32.mrf.mxu0
    %v1870 = vadd.f32 %v1847, %v1869
    %v1871 = vpop.f32.mrf.mxu0
    %v1872 = vadd.f32 %v1852, %v1871
    %1873 = vdwg.mxu0
    %1874 = vmatpush.bf16.msra.mxu0 %v1835
    %1875 = vmatpush.bf16.msra.mxu0 %v1827
    %1876 = vmatpush.bf16.msra.mxu0 %v1819
    %1877 = vmatpush.bf16.msra.mxu0 %v1811
    %1878 = vmatpush.bf16.msra.mxu0 %v1803
    %1879 = vmatpush.bf16.msra.mxu0 %v1795
    %1880 = vmatpush.bf16.msra.mxu0 %v1787
    %1881 = vmatpush.bf16.msra.mxu0 %v1779
    %1882 = vmatmul.bf16.gmra.mxu0 %v1858
    %v1883 = vpop.f32.mrf.mxu0
    %v1884 = vadd.f32 %v1847, %v1883
    %v1885 = vpop.f32.mrf.mxu0
    %v1886 = vadd.f32 %v1852, %v1885
    %1887 = vdwg.mxu0
    %1888 = vmatpush.bf16.msra.mxu0 %v1836
    %1889 = vmatpush.bf16.msra.mxu0 %v1828
    %1890 = vmatpush.bf16.msra.mxu0 %v1820
    %1891 = vmatpush.bf16.msra.mxu0 %v1812
    %1892 = vmatpush.bf16.msra.mxu0 %v1804
    %1893 = vmatpush.bf16.msra.mxu0 %v1796
    %1894 = vmatpush.bf16.msra.mxu0 %v1788
    %1895 = vmatpush.bf16.msra.mxu0 %v1780
    %1896 = vmatmul.bf16.gmra.mxu0 %v1858
    %v1897 = vpop.f32.mrf.mxu0
    %v1898 = vadd.f32 %v1847, %v1897
    %v1899 = vpop.f32.mrf.mxu0
    %v1900 = vadd.f32 %v1852, %v1899
    %1901 = vdwg.mxu0
    %1902 = vmatpush.bf16.msra.mxu0 %v1837
    %1903 = vmatpush.bf16.msra.mxu0 %v1829
    %1904 = vmatpush.bf16.msra.mxu0 %v1821
    %1905 = vmatpush.bf16.msra.mxu0 %v1813
    %1906 = vmatpush.bf16.msra.mxu0 %v1805
    %1907 = vmatpush.bf16.msra.mxu0 %v1797
    %1908 = vmatpush.bf16.msra.mxu0 %v1789
    %1909 = vmatpush.bf16.msra.mxu0 %v1781
    %1910 = vmatmul.bf16.gmra.mxu0 %v1858
    %v1911 = vpop.f32.mrf.mxu0
    %v1912 = vadd.f32 %v1847, %v1911
    %v1913 = vpop.f32.mrf.mxu0
    %v1914 = vadd.f32 %v1852, %v1913
    %1915 = vdwg.mxu0
    %1916 = vmatpush.bf16.msra.mxu0 %v1838
    %1917 = vmatpush.bf16.msra.mxu0 %v1830
    %1918 = vmatpush.bf16.msra.mxu0 %v1822
    %1919 = vmatpush.bf16.msra.mxu0 %v1814
    %1920 = vmatpush.bf16.msra.mxu0 %v1806
    %1921 = vmatpush.bf16.msra.mxu0 %v1798
    %1922 = vmatpush.bf16.msra.mxu0 %v1790
    %1923 = vmatpush.bf16.msra.mxu0 %v1782
    %1924 = vmatmul.bf16.gmra.mxu0 %v1858
    %v1925 = vpop.f32.mrf.mxu0
    %v1926 = vadd.f32 %v1847, %v1925
    %v1927 = vpop.f32.mrf.mxu0
    %v1928 = vadd.f32 %v1852, %v1927
    %1929 = vdwg.mxu0
    %1930 = vmatpush.bf16.msra.mxu0 %v1839
    %1931 = vmatpush.bf16.msra.mxu0 %v1831
    %1932 = vmatpush.bf16.msra.mxu0 %v1823
    %1933 = vmatpush.bf16.msra.mxu0 %v1815
    %1934 = vmatpush.bf16.msra.mxu0 %v1807
    %1935 = vmatpush.bf16.msra.mxu0 %v1799
    %1936 = vmatpush.bf16.msra.mxu0 %v1791
    %1937 = vmatpush.bf16.msra.mxu0 %v1783
    %1938 = vmatmul.bf16.gmra.mxu0 %v1858
    %v1939 = vpop.f32.mrf.mxu0
    %v1940 = vadd.f32 %v1847, %v1939
    %v1941 = vpop.f32.mrf.mxu0
    %v1942 = vadd.f32 %v1852, %v1941
    %1943 = vdwg.mxu0
    %1944 = vmatpush.bf16.msra.mxu0 %v1840
    %1945 = vmatpush.bf16.msra.mxu0 %v1832
    %1946 = vmatpush.bf16.msra.mxu0 %v1824
    %1947 = vmatpush.bf16.msra.mxu0 %v1816
    %1948 = vmatpush.bf16.msra.mxu0 %v1808
    %1949 = vmatpush.bf16.msra.mxu0 %v1800
    %1950 = vmatpush.bf16.msra.mxu0 %v1792
    %1951 = vmatpush.bf16.msra.mxu0 %v1784
    %1952 = vmatmul.bf16.gmra.mxu0 %v1858
    %v1953 = vpop.f32.mrf.mxu0
    %v1954 = vadd.f32 %v1847, %v1953
    %v1955 = vpop.f32.mrf.mxu0
    %v1956 = vadd.f32 %v1852, %v1955
    %1957 = vdwg.mxu0
    %1958 = vmatpush.bf16.msra.mxu0 %v1841
    %1959 = vmatpush.bf16.msra.mxu0 %v1833
    %1960 = vmatpush.bf16.msra.mxu0 %v1825
    %1961 = vmatpush.bf16.msra.mxu0 %v1817
    %1962 = vmatpush.bf16.msra.mxu0 %v1809
    %1963 = vmatpush.bf16.msra.mxu0 %v1801
    %1964 = vmatpush.bf16.msra.mxu0 %v1793
    %1965 = vmatpush.bf16.msra.mxu0 %v1785
    %1966 = vmatmul.bf16.gmra.mxu0 %v1858
    %v1967 = vpop.f32.mrf.mxu0
    %v1968 = vadd.f32 %v1847, %v1967
    %v1969 = vpop.f32.mrf.mxu0
    %v1970 = vadd.f32 %v1852, %v1969
    %1971 = vdwg.mxu0
    %1972 = vst [vmem:[#allocation2] sm:$0xff] %v1870
    %1973 = vst [vmem:[#allocation2 + $0x8] sm:$0xff] %v1884
    %1974 = vst [vmem:[#allocation2 + $0x10] sm:$0xff] %v1898
    %1975 = vst [vmem:[#allocation2 + $0x18] sm:$0xff] %v1912
    %1976 = vst [vmem:[#allocation2 + $0x20] sm:$0xff] %v1926
    %1977 = vst [vmem:[#allocation2 + $0x28] sm:$0xff] %v1940
    %1978 = vst [vmem:[#allocation2 + $0x30] sm:$0xff] %v1954
    %1979 = vst [vmem:[#allocation2 + $0x38] sm:$0xff] %v1968
    %1980 = vst [vmem:[#allocation2 + $0x40] sm:$0xff] %v1872
    %1981 = vst [vmem:[#allocation2 + $0x48] sm:$0xff] %v1886
    %1982 = vst [vmem:[#allocation2 + $0x50] sm:$0xff] %v1900
    %1983 = vst [vmem:[#allocation2 + $0x58] sm:$0xff] %v1914
    %1984 = vst [vmem:[#allocation2 + $0x60] sm:$0xff] %v1928
    %1985 = vst [vmem:[#allocation2 + $0x68] sm:$0xff] %v1942
    %1986 = vst [vmem:[#allocation2 + $0x70] sm:$0xff] %v1956
    %1987 = vst [vmem:[#allocation2 + $0x78] sm:$0xff] %v1970
    // Predicated region
    $region22: #{mlp_forward.1} parent=1 // pred_check
      _
    $region23: #{mlp_forward.1} parent=1 // pred_check_branch
      %1989 = sbr.rel (0) target = $region25
    $region24: #{mlp_forward.1} parent=1 // pred_region
      %1991 = vsyncadd [#allocation3], 0
      %s1992 = sshll.u32 [#allocation2], 4
      %s1993 = int_to_ptr.vmem [resolvable:$true] %s1992
      %s1994 = sshll.u32 %s5, 4
      %s1995 = int_to_ptr.hbm [resolvable:$true] %s1994
      %2000 = dma.vmem_to_hbm [thread:$0]  %s1993, 2048, %s1995, [#allocation3], 1024, 1024, 64
    $region25: #{mlp_forward.1} parent=1 // pred_fallthru
      _
    // Predicated region
    $region26: #{mlp_forward.1} parent=1 // pred_check
      _
    $region27: #{mlp_forward.1} parent=1 // pred_check_branch
      %2002 = sbr.rel (0) target = $region29
    $region28: #{mlp_forward.1} parent=1 // pred_region
      %2004 = dma.done [#allocation3], 2048
    $region29: #{mlp_forward.1} parent=1 // pred_fallthru
      _
    %2005 = vsyncpa [#allocation3], 1

</llo_original>
